<compile_context>
chip_gen: v7x
topology: tpu7x:2x2x1
jax: 0.10.0
libtpu: 0.0.40
codegen_flags: <defaults>
</compile_context>

<pallas_src>
import functools

import jax
import jax.numpy as jnp
from jax import lax
from jax.experimental import pallas as pl
from jax.experimental.pallas import tpu as pltpu

K = 7      # conv kernel size
DIL = 2    # dilation
PAD = 6    # padding;  L_out = L + 2*PAD - DIL*(K-1) = L


# ----------------------------------------------------------------------------
# Fused kernel: conv1+BN+ReLU -> conv2+BN -> GCModule('mul') -> +identity -> ReLU
# ----------------------------------------------------------------------------
def _residual_block_kernel(x_ref, w1_ref, w2_ref, ch_ref, wca1_ref, wca2_ref,
                           crp_ref, o_ref, xpad_ref, *, nb, length):
    # x_ref    : (nb, C, L)          bf16  input (also the residual identity)
    # w1_ref   : (C, K*C)            bf16  conv1 weight, tap-major im2col layout
    # w2_ref   : (C, K*C)            bf16  conv2 weight, tap-major im2col layout
    # ch_ref   : (C, 6)              f32   [bn1_scale, bn1_shift, bn2_scale,
    #                                       bn2_shift, conv_mask w, ca-conv2 bias]
    # wca1_ref : (Cr, C)             f32   channel-att conv1 weight
    # wca2_ref : (C, Cr)             f32   channel-att conv2 weight
    # crp_ref  : (Cr, 4)             f32   [ca1 bias, LN gamma, LN beta, conv_mask b]
    # o_ref    : (nb, C, L)          bf16
    # xpad_ref : (nb, C, L + 2*PAD)  bf16  zero-haloed conv input (VMEM scratch)
    C = x_ref.shape[1]
    L = length
    Lp = L + 2 * PAD

    scale1, shift1 = ch_ref[:, 0:1], ch_ref[:, 1:2]
    scale2, shift2 = ch_ref[:, 2:3], ch_ref[:, 3:4]
    wm = ch_ref[:, 4:5]                       # (C, 1) conv_mask weight
    b_ca2 = ch_ref[:, 5:6]                    # (C, 1)
    b_ca1 = crp_ref[:, 0:1]                   # (Cr, 1)
    ln_g = crp_ref[:, 1:2]
    ln_b = crp_ref[:, 2:3]
    bm = crp_ref[0:1, 3:4]                    # (1, 1) conv_mask bias

    # Zero ONLY the halo lanes (centre is fully overwritten before each conv);
    # kept per-step so scratch reuse never exposes stale halo data.
    zhalo = jnp.zeros((C, PAD), dtype=xpad_ref.dtype)
    for b in range(nb):
        xpad_ref[b, :, 0:PAD] = zhalo
        xpad_ref[b, :, PAD + L:Lp] = zhalo

    def dilated_conv(w_ref):
        # im2col assembled as a VALUE (no VMEM scratch round trip):
        # tap-major rows, batch blocks lane-concatenated at 128-aligned
        # boundaries, then ONE (C, K*C) @ (K*C, nb*L) MXU matmul.
        rows = []
        for t in range(K):
            rows.append(jnp.concatenate(
                [xpad_ref[b, :, t * DIL:t * DIL + L] for b in range(nb)],
                axis=-1))                                        # (C, nb*L)
        rhs = jnp.concatenate(rows, axis=0)                      # (K*C, nb*L)
        return jnp.dot(w_ref[...], rhs,
                       preferred_element_type=jnp.float32)       # (C, nb*L) f32

    # ---- conv1 (k=7, dil=2, pad=6) + folded BN + ReLU -----------------------
    for b in range(nb):
        xpad_ref[b, :, PAD:PAD + L] = x_ref[b]
    h = dilated_conv(w1_ref)
    h = jnp.maximum(h * scale1 + shift1, 0.0)
    # TODO(synk): nn.Dropout(0.3) is identity here (eval-mode semantics).

    # ---- conv2 (k=7, dil=2, pad=6) + folded BN ------------------------------
    for b in range(nb):
        xpad_ref[b, :, PAD:PAD + L] = h[:, b * L:(b + 1) * L].astype(xpad_ref.dtype)
    h = dilated_conv(w2_ref)
    h = h * scale2 + shift2                                      # (C, nb*L) f32

    # ---- GCModule (mode='mul') + residual add + final ReLU, per batch -------
    cr_dim = wca1_ref.shape[0]
    for b in range(nb):
        hb = h[:, b * L:(b + 1) * L]                             # (C, L) f32, lane-aligned
        # spatial attention: 1-channel 1x1 conv -> softmax over L -> weighted sum
        logits = jnp.sum(hb * wm, axis=0, keepdims=True) + bm    # (1, L)
        logits = logits - jnp.max(logits, axis=-1, keepdims=True)
        e = jnp.exp(logits)
        p = e / jnp.sum(e, axis=-1, keepdims=True)               # exact; off crit. path
        context = jnp.sum(hb * p, axis=-1, keepdims=True)        # (C, 1)

        # channel attention: 1x1 conv -> LayerNorm([Cr,1]) -> ReLU -> 1x1 conv
        # (tiny f32 dots; negligible cost, keeps numerics tight)
        a = jnp.dot(wca1_ref[...], context,
                    preferred_element_type=jnp.float32) + b_ca1  # (Cr, 1)
        mu = jnp.sum(a, axis=0, keepdims=True) / cr_dim
        var = jnp.sum((a - mu) ** 2, axis=0, keepdims=True) / cr_dim
        a = (a - mu) * lax.rsqrt(var + 1e-5) * ln_g + ln_b
        a = jnp.maximum(a, 0.0)
        att = jnp.dot(wca2_ref[...], a,
                      preferred_element_type=jnp.float32) + b_ca2  # (C, 1)

        # gate, residual add (identity read here, not held live), final ReLU
        # (second dropout = identity in eval mode)
        out_b = jnp.maximum(hb * jax.nn.sigmoid(att)
                            + x_ref[b].astype(jnp.float32), 0.0)
        o_ref[b] = out_b.astype(o_ref.dtype)


# ----------------------------------------------------------------------------
# Wrapper
# ----------------------------------------------------------------------------
def fold_bn(conv_bias, gamma, beta, mean, var, eps=1e-5):
    scale = gamma / jnp.sqrt(var + eps)
    shift = beta + (conv_bias - mean) * scale
    return scale, shift


def residual_block_pallas(x, P, *, nb=None, out_dtype=jnp.bfloat16):
    N, C, L = x.shape
    Cr = P["w_ca1"].shape[0]
    if nb is None:
        # 2 batch elements per step fills 256 MXU lanes at L=128.  For v7x,
        # prefer keeping N // nb >= 2 so both TensorCores get work.
        nb = 2 if N % 2 == 0 else 1
    assert N % nb == 0

    scale1, shift1 = fold_bn(P["b1c"], P["g1"], P["be1"], P["m1"], P["v1"])
    scale2, shift2 = fold_bn(P["b2c"], P["g2"], P["be2"], P["m2"], P["v2"])

    # conv weights: (C_out, C_in, K) -> tap-major (C_out, K*C_in), bf16 for the MXU
    w1_flat = jnp.transpose(P["w1c"], (0, 2, 1)).reshape(C, K * C).astype(jnp.bfloat16)
    w2_flat = jnp.transpose(P["w2c"], (0, 2, 1)).reshape(C, K * C).astype(jnp.bfloat16)

    # pack the small per-channel operands into two arrays (fewer DMA descriptors)
    ch = jnp.stack(
        [scale1, shift1, scale2, shift2, P["wm"][0, :, 0], P["b_ca2"]], axis=1
    ).astype(jnp.float32)                                          # (C, 6)
    crp = jnp.concatenate(
        [P["b_ca1"][:, None], P["ln_g"], P["ln_b"],
         jnp.broadcast_to(P["bm"].reshape(1, 1), (Cr, 1))], axis=1
    ).astype(jnp.float32)                                          # (Cr, 4)

    wca1 = P["w_ca1"][:, :, 0].astype(jnp.float32)                 # (Cr, C)
    wca2 = P["w_ca2"][:, :, 0].astype(jnp.float32)                 # (C, Cr)

    x_bf = x.astype(jnp.bfloat16)

    flops = 2 * 2 * C * (K * C) * N * L + N * (6 * C * L + 4 * C * Cr)
    bytes_accessed = (x_bf.size * 2 + N * C * L * 2 + 2 * w1_flat.size * 2
                      + (ch.size + crp.size + wca1.size + wca2.size) * 4)

    kernel = functools.partial(_residual_block_kernel, nb=nb, length=L)
    return pl.pallas_call(
        kernel,
        out_shape=jax.ShapeDtypeStruct((N, C, L), out_dtype),
        grid_spec=pltpu.PrefetchScalarGridSpec(
            num_scalar_prefetch=0,
            grid=(N // nb,),
            in_specs=[
                pl.BlockSpec((nb, C, L), lambda g: (g, 0, 0)),
                pl.BlockSpec((C, K * C), lambda g: (0, 0)),
                pl.BlockSpec((C, K * C), lambda g: (0, 0)),
                pl.BlockSpec((C, 6), lambda g: (0, 0)),
                pl.BlockSpec((Cr, C), lambda g: (0, 0)),
                pl.BlockSpec((C, Cr), lambda g: (0, 0)),
                pl.BlockSpec((Cr, 4), lambda g: (0, 0)),
            ],
            out_specs=pl.BlockSpec((nb, C, L), lambda g: (g, 0, 0)),
            scratch_shapes=[
                pltpu.VMEM((nb, C, L + 2 * PAD), jnp.bfloat16),   # padded conv input
            ],
        ),
        compiler_params=pltpu.CompilerParams(dimension_semantics=("parallel",)),
        cost_estimate=pl.CostEstimate(
            flops=flops,
            transcendentals=N * (L + C + Cr + 4),
            bytes_accessed=bytes_accessed),
    )(x_bf, w1_flat, w2_flat, ch, wca1, wca2, crp)


# ----------------------------------------------------------------------------
# Pure-JAX reference (f32) and parameter init
# ----------------------------------------------------------------------------
def residual_block_ref(x, P):
    def conv1d(inp, w, b, dilation, padding):
        out = lax.conv_general_dilated(
            inp, w, window_strides=(1,), padding=[(padding, padding)],
            rhs_dilation=(dilation,), dimension_numbers=("NCH", "OIH", "NCH"))
        return out + b[None, :, None]

    def bn(inp, gamma, beta, mean, var, eps=1e-5):
        return (inp - mean[None, :, None]) / jnp.sqrt(var[None, :, None] + eps) \
            * gamma[None, :, None] + beta[None, :, None]

    identity = x
    h = jnp.maximum(bn(conv1d(x, P["w1c"], P["b1c"], 2, 6), P["g1"], P["be1"], P["m1"], P["v1"]), 0.0)
    h = bn(conv1d(h, P["w2c"], P["b2c"], 2, 6), P["g2"], P["be2"], P["m2"], P["v2"])

    # GCModule (mul mode)
    logits = jnp.einsum("oc,ncl->nol", P["wm"][:, :, 0], h) + P["bm"][None, :, None]  # (N,1,L)
    p = jax.nn.softmax(logits, axis=2)
    context = jnp.einsum("ncl,nl->nc", h, p[:, 0, :])[:, :, None]                     # (N,C,1)
    a = jnp.einsum("rc,ncx->nrx", P["w_ca1"][:, :, 0], context) + P["b_ca1"][None, :, None]
    mu = jnp.mean(a, axis=(1, 2), keepdims=True)
    var = jnp.mean((a - mu) ** 2, axis=(1, 2), keepdims=True)
    a = (a - mu) / jnp.sqrt(var + 1e-5) * P["ln_g"][None] + P["ln_b"][None]
    a = jnp.maximum(a, 0.0)
    att = jnp.einsum("cr,nrx->ncx", P["w_ca2"][:, :, 0], a) + P["b_ca2"][None, :, None]
    h = h * jax.nn.sigmoid(att)

    return jnp.maximum(h + identity, 0.0)


def init_params(key, c_in, c_out, reduction=16):
    cr = c_out // reduction
    ks = jax.random.split(key, 12)
    n = lambda k, s, sc=0.1: (jax.random.normal(k, s, jnp.float32) * sc)
    return {
        "w1c": n(ks[0], (c_out, c_in, 7)), "b1c": n(ks[1], (c_out,)),
        "g1": 1.0 + n(ks[2], (c_out,), 0.05), "be1": n(ks[2], (c_out,)),
        "m1": n(ks[3], (c_out,)), "v1": 1.0 + jnp.abs(n(ks[3], (c_out,), 0.05)),
        "w2c": n(ks[4], (c_out, c_out, 7)), "b2c": n(ks[5], (c_out,)),
        "g2": 1.0 + n(ks[6], (c_out,), 0.05), "be2": n(ks[6], (c_out,)),
        "m2": n(ks[7], (c_out,)), "v2": 1.0 + jnp.abs(n(ks[7], (c_out,), 0.05)),
        "wm": n(ks[8], (1, c_out, 1)), "bm": n(ks[8], (1,)),
        "w_ca1": n(ks[9], (cr, c_out, 1)), "b_ca1": n(ks[9], (cr,)),
        "ln_g": 1.0 + n(ks[10], (cr, 1), 0.05), "ln_b": n(ks[10], (cr, 1)),
        "w_ca2": n(ks[11], (c_out, cr, 1)), "b_ca2": n(ks[11], (c_out,)),
    }


if __name__ == "__main__":
    # batch, channels (in == out for the down=False residual path), length
    # L = 128 keeps the output tile lane-dense (full 128-lane vregs / stores);
    # with nb=2 batch elements per step the MXU lane dim is 256.
    N, C, L = 2, 32, 128
    key = jax.random.PRNGKey(0)
    kx, kp = jax.random.split(key)
    x = jax.random.normal(kx, (N, C, L), jnp.float32)
    P = init_params(kp, C, C)

    out = jax.jit(residual_block_pallas)(x, P)
    out = jax.block_until_ready(out)

    ref = residual_block_ref(x, P)
    assert out.shape == (N, C, L)
    out_f32 = out.astype(jnp.float32)
    err = jnp.max(jnp.abs(out_f32 - ref))
    # bf16 MXU operands + bf16 output -> tolerance loosened vs pure-f32 reference.
    assert jnp.allclose(out_f32, ref, rtol=5e-2, atol=5e-2), f"max abs err {err}"

    print("KERNEL_OK")
</pallas_src>

<mosaic_0001>
module attributes {stable_mosaic.version = 11 : i64} {
  func.func @_residual_block_kernel(%arg0: i32, %arg1: memref<2x32x128xbf16, #tpu.memory_space<vmem>>, %arg2: memref<32x224xbf16, #tpu.memory_space<vmem>>, %arg3: memref<32x224xbf16, #tpu.memory_space<vmem>>, %arg4: memref<32x6xf32, #tpu.memory_space<vmem>>, %arg5: memref<2x32xf32, #tpu.memory_space<vmem>>, %arg6: memref<32x2xf32, #tpu.memory_space<vmem>>, %arg7: memref<2x4xf32, #tpu.memory_space<vmem>>, %arg8: memref<2x32x128xbf16, #tpu.memory_space<vmem>>, %arg9: memref<2x32x140xbf16, #tpu.memory_space<vmem>>) attributes {dimension_semantics = [#tpu.dimension_semantics<parallel>], iteration_bounds = array<i64: 1>, scalar_prefetch = 0 : i64, scratch_operands = 1 : i64, tpu.core_type = #tpu.core_type<tc>, window_params = [{transform_indices = @transform_0, window_bounds = array<i64: 2, 32, 128>}, {pipeline_mode = #tpu.pipeline_mode<synchronous>, transform_indices = @transform_1, window_bounds = array<i64: 32, 224>}, {pipeline_mode = #tpu.pipeline_mode<synchronous>, transform_indices = @transform_2, window_bounds = array<i64: 32, 224>}, {pipeline_mode = #tpu.pipeline_mode<synchronous>, transform_indices = @transform_3, window_bounds = array<i64: 32, 6>}, {pipeline_mode = #tpu.pipeline_mode<synchronous>, transform_indices = @transform_4, window_bounds = array<i64: 2, 32>}, {pipeline_mode = #tpu.pipeline_mode<synchronous>, transform_indices = @transform_5, window_bounds = array<i64: 32, 2>}, {pipeline_mode = #tpu.pipeline_mode<synchronous>, transform_indices = @transform_6, window_bounds = array<i64: 2, 4>}, {transform_indices = @transform_7, window_bounds = array<i64: 2, 32, 128>}]} {
    %c0 = arith.constant 0 : index
    %c0_0 = arith.constant 0 : index
    %0 = vector.load %arg4[%c0, %c0_0] : memref<32x6xf32, #tpu.memory_space<vmem>>, vector<32x1xf32>
    %c0_1 = arith.constant 0 : index
    %c1 = arith.constant 1 : index
    %1 = vector.load %arg4[%c0_1, %c1] : memref<32x6xf32, #tpu.memory_space<vmem>>, vector<32x1xf32>
    %c0_2 = arith.constant 0 : index
    %c2 = arith.constant 2 : index
    %2 = vector.load %arg4[%c0_2, %c2] : memref<32x6xf32, #tpu.memory_space<vmem>>, vector<32x1xf32>
    %c0_3 = arith.constant 0 : index
    %c3 = arith.constant 3 : index
    %3 = vector.load %arg4[%c0_3, %c3] : memref<32x6xf32, #tpu.memory_space<vmem>>, vector<32x1xf32>
    %c0_4 = arith.constant 0 : index
    %c4 = arith.constant 4 : index
    %4 = vector.load %arg4[%c0_4, %c4] : memref<32x6xf32, #tpu.memory_space<vmem>>, vector<32x1xf32>
    %c0_5 = arith.constant 0 : index
    %c5 = arith.constant 5 : index
    %5 = vector.load %arg4[%c0_5, %c5] : memref<32x6xf32, #tpu.memory_space<vmem>>, vector<32x1xf32>
    %c0_6 = arith.constant 0 : index
    %c0_7 = arith.constant 0 : index
    %6 = vector.load %arg7[%c0_6, %c0_7] : memref<2x4xf32, #tpu.memory_space<vmem>>, vector<2x1xf32>
    %c0_8 = arith.constant 0 : index
    %c1_9 = arith.constant 1 : index
    %7 = vector.load %arg7[%c0_8, %c1_9] : memref<2x4xf32, #tpu.memory_space<vmem>>, vector<2x1xf32>
    %c0_10 = arith.constant 0 : index
    %c2_11 = arith.constant 2 : index
    %8 = vector.load %arg7[%c0_10, %c2_11] : memref<2x4xf32, #tpu.memory_space<vmem>>, vector<2x1xf32>
    %c0_12 = arith.constant 0 : index
    %c3_13 = arith.constant 3 : index
    %9 = vector.load %arg7[%c0_12, %c3_13] : memref<2x4xf32, #tpu.memory_space<vmem>>, vector<1x1xf32>
    %cst = arith.constant 0.000000e+00 : bf16
    %10 = vector.broadcast %cst : bf16 to vector<32x6xbf16>
    %c0_14 = arith.constant 0 : index
    %c0_15 = arith.constant 0 : index
    %c0_16 = arith.constant 0 : index
    %11 = vector.load %arg9[%c0_14, %c0_15, %c0_16] : memref<2x32x140xbf16, #tpu.memory_space<vmem>>, vector<1x32x6xbf16>
    %12 = vector.shape_cast %11 : vector<1x32x6xbf16> to vector<32x6xbf16>
    %13 = vector.shape_cast %10 : vector<32x6xbf16> to vector<1x32x6xbf16>
    tpu.vector_store %arg9[%c0_14, %c0_15, %c0_16], %13 {strides = array<i32>} : memref<2x32x140xbf16, #tpu.memory_space<vmem>>, vector<1x32x6xbf16>,
    %c0_17 = arith.constant 0 : index
    %c0_18 = arith.constant 0 : index
    %c134 = arith.constant 134 : index
    %14 = vector.load %arg9[%c0_17, %c0_18, %c134] : memref<2x32x140xbf16, #tpu.memory_space<vmem>>, vector<1x32x6xbf16>
    %15 = vector.shape_cast %14 : vector<1x32x6xbf16> to vector<32x6xbf16>
    %16 = vector.shape_cast %10 : vector<32x6xbf16> to vector<1x32x6xbf16>
    tpu.vector_store %arg9[%c0_17, %c0_18, %c134], %16 {strides = array<i32>} : memref<2x32x140xbf16, #tpu.memory_space<vmem>>, vector<1x32x6xbf16>,
    %c1_19 = arith.constant 1 : index
    %c0_20 = arith.constant 0 : index
    %c0_21 = arith.constant 0 : index
    %17 = vector.load %arg9[%c1_19, %c0_20, %c0_21] : memref<2x32x140xbf16, #tpu.memory_space<vmem>>, vector<1x32x6xbf16>
    %18 = vector.shape_cast %17 : vector<1x32x6xbf16> to vector<32x6xbf16>
    %19 = vector.shape_cast %10 : vector<32x6xbf16> to vector<1x32x6xbf16>
    tpu.vector_store %arg9[%c1_19, %c0_20, %c0_21], %19 {strides = array<i32>} : memref<2x32x140xbf16, #tpu.memory_space<vmem>>, vector<1x32x6xbf16>,
    %c1_22 = arith.constant 1 : index
    %c0_23 = arith.constant 0 : index
    %c134_24 = arith.constant 134 : index
    %20 = vector.load %arg9[%c1_22, %c0_23, %c134_24] : memref<2x32x140xbf16, #tpu.memory_space<vmem>>, vector<1x32x6xbf16>
    %21 = vector.shape_cast %20 : vector<1x32x6xbf16> to vector<32x6xbf16>
    %22 = vector.shape_cast %10 : vector<32x6xbf16> to vector<1x32x6xbf16>
    tpu.vector_store %arg9[%c1_22, %c0_23, %c134_24], %22 {strides = array<i32>} : memref<2x32x140xbf16, #tpu.memory_space<vmem>>, vector<1x32x6xbf16>,
    %c0_25 = arith.constant 0 : index
    %c0_26 = arith.constant 0 : index
    %c0_27 = arith.constant 0 : index
    %23 = vector.load %arg1[%c0_25, %c0_26, %c0_27] : memref<2x32x128xbf16, #tpu.memory_space<vmem>>, vector<1x32x128xbf16>
    %24 = vector.shape_cast %23 : vector<1x32x128xbf16> to vector<32x128xbf16>
    %c0_28 = arith.constant 0 : index
    %c0_29 = arith.constant 0 : index
    %c6 = arith.constant 6 : index
    %25 = vector.load %arg9[%c0_28, %c0_29, %c6] : memref<2x32x140xbf16, #tpu.memory_space<vmem>>, vector<1x32x128xbf16>
    %26 = vector.shape_cast %25 : vector<1x32x128xbf16> to vector<32x128xbf16>
    %27 = vector.shape_cast %24 : vector<32x128xbf16> to vector<1x32x128xbf16>
    tpu.vector_store %arg9[%c0_28, %c0_29, %c6], %27 {strides = array<i32>} : memref<2x32x140xbf16, #tpu.memory_space<vmem>>, vector<1x32x128xbf16>,
    %c1_30 = arith.constant 1 : index
    %c0_31 = arith.constant 0 : index
    %c0_32 = arith.constant 0 : index
    %28 = vector.load %arg1[%c1_30, %c0_31, %c0_32] : memref<2x32x128xbf16, #tpu.memory_space<vmem>>, vector<1x32x128xbf16>
    %29 = vector.shape_cast %28 : vector<1x32x128xbf16> to vector<32x128xbf16>
    %c1_33 = arith.constant 1 : index
    %c0_34 = arith.constant 0 : index
    %c6_35 = arith.constant 6 : index
    %30 = vector.load %arg9[%c1_33, %c0_34, %c6_35] : memref<2x32x140xbf16, #tpu.memory_space<vmem>>, vector<1x32x128xbf16>
    %31 = vector.shape_cast %30 : vector<1x32x128xbf16> to vector<32x128xbf16>
    %32 = vector.shape_cast %29 : vector<32x128xbf16> to vector<1x32x128xbf16>
    tpu.vector_store %arg9[%c1_33, %c0_34, %c6_35], %32 {strides = array<i32>} : memref<2x32x140xbf16, #tpu.memory_space<vmem>>, vector<1x32x128xbf16>,
    %c0_36 = arith.constant 0 : index
    %c0_37 = arith.constant 0 : index
    %c0_38 = arith.constant 0 : index
    %33 = vector.load %arg9[%c0_36, %c0_37, %c0_38] : memref<2x32x140xbf16, #tpu.memory_space<vmem>>, vector<1x32x128xbf16>
    %34 = vector.shape_cast %33 : vector<1x32x128xbf16> to vector<32x128xbf16>
    %c1_39 = arith.constant 1 : index
    %c0_40 = arith.constant 0 : index
    %c0_41 = arith.constant 0 : index
    %35 = vector.load %arg9[%c1_39, %c0_40, %c0_41] : memref<2x32x140xbf16, #tpu.memory_space<vmem>>, vector<1x32x128xbf16>
    %36 = vector.shape_cast %35 : vector<1x32x128xbf16> to vector<32x128xbf16>
    %37 = tpu.concatenate %34, %36 in 1 : vector<32x128xbf16>, vector<32x128xbf16> -> vector<32x256xbf16>
    %c0_42 = arith.constant 0 : index
    %c0_43 = arith.constant 0 : index
    %c2_44 = arith.constant 2 : index
    %38 = vector.load %arg9[%c0_42, %c0_43, %c2_44] : memref<2x32x140xbf16, #tpu.memory_space<vmem>>, vector<1x32x128xbf16>
    %39 = vector.shape_cast %38 : vector<1x32x128xbf16> to vector<32x128xbf16>
    %c1_45 = arith.constant 1 : index
    %c0_46 = arith.constant 0 : index
    %c2_47 = arith.constant 2 : index
    %40 = vector.load %arg9[%c1_45, %c0_46, %c2_47] : memref<2x32x140xbf16, #tpu.memory_space<vmem>>, vector<1x32x128xbf16>
    %41 = vector.shape_cast %40 : vector<1x32x128xbf16> to vector<32x128xbf16>
    %42 = tpu.concatenate %39, %41 in 1 : vector<32x128xbf16>, vector<32x128xbf16> -> vector<32x256xbf16>
    %c0_48 = arith.constant 0 : index
    %c0_49 = arith.constant 0 : index
    %c4_50 = arith.constant 4 : index
    %43 = vector.load %arg9[%c0_48, %c0_49, %c4_50] : memref<2x32x140xbf16, #tpu.memory_space<vmem>>, vector<1x32x128xbf16>
    %44 = vector.shape_cast %43 : vector<1x32x128xbf16> to vector<32x128xbf16>
    %c1_51 = arith.constant 1 : index
    %c0_52 = arith.constant 0 : index
    %c4_53 = arith.constant 4 : index
    %45 = vector.load %arg9[%c1_51, %c0_52, %c4_53] : memref<2x32x140xbf16, #tpu.memory_space<vmem>>, vector<1x32x128xbf16>
    %46 = vector.shape_cast %45 : vector<1x32x128xbf16> to vector<32x128xbf16>
    %47 = tpu.concatenate %44, %46 in 1 : vector<32x128xbf16>, vector<32x128xbf16> -> vector<32x256xbf16>
    %c0_54 = arith.constant 0 : index
    %c0_55 = arith.constant 0 : index
    %c6_56 = arith.constant 6 : index
    %48 = vector.load %arg9[%c0_54, %c0_55, %c6_56] : memref<2x32x140xbf16, #tpu.memory_space<vmem>>, vector<1x32x128xbf16>
    %49 = vector.shape_cast %48 : vector<1x32x128xbf16> to vector<32x128xbf16>
    %c1_57 = arith.constant 1 : index
    %c0_58 = arith.constant 0 : index
    %c6_59 = arith.constant 6 : index
    %50 = vector.load %arg9[%c1_57, %c0_58, %c6_59] : memref<2x32x140xbf16, #tpu.memory_space<vmem>>, vector<1x32x128xbf16>
    %51 = vector.shape_cast %50 : vector<1x32x128xbf16> to vector<32x128xbf16>
    %52 = tpu.concatenate %49, %51 in 1 : vector<32x128xbf16>, vector<32x128xbf16> -> vector<32x256xbf16>
    %c0_60 = arith.constant 0 : index
    %c0_61 = arith.constant 0 : index
    %c8 = arith.constant 8 : index
    %53 = vector.load %arg9[%c0_60, %c0_61, %c8] : memref<2x32x140xbf16, #tpu.memory_space<vmem>>, vector<1x32x128xbf16>
    %54 = vector.shape_cast %53 : vector<1x32x128xbf16> to vector<32x128xbf16>
    %c1_62 = arith.constant 1 : index
    %c0_63 = arith.constant 0 : index
    %c8_64 = arith.constant 8 : index
    %55 = vector.load %arg9[%c1_62, %c0_63, %c8_64] : memref<2x32x140xbf16, #tpu.memory_space<vmem>>, vector<1x32x128xbf16>
    %56 = vector.shape_cast %55 : vector<1x32x128xbf16> to vector<32x128xbf16>
    %57 = tpu.concatenate %54, %56 in 1 : vector<32x128xbf16>, vector<32x128xbf16> -> vector<32x256xbf16>
    %c0_65 = arith.constant 0 : index
    %c0_66 = arith.constant 0 : index
    %c10 = arith.constant 10 : index
    %58 = vector.load %arg9[%c0_65, %c0_66, %c10] : memref<2x32x140xbf16, #tpu.memory_space<vmem>>, vector<1x32x128xbf16>
    %59 = vector.shape_cast %58 : vector<1x32x128xbf16> to vector<32x128xbf16>
    %c1_67 = arith.constant 1 : index
    %c0_68 = arith.constant 0 : index
    %c10_69 = arith.constant 10 : index
    %60 = vector.load %arg9[%c1_67, %c0_68, %c10_69] : memref<2x32x140xbf16, #tpu.memory_space<vmem>>, vector<1x32x128xbf16>
    %61 = vector.shape_cast %60 : vector<1x32x128xbf16> to vector<32x128xbf16>
    %62 = tpu.concatenate %59, %61 in 1 : vector<32x128xbf16>, vector<32x128xbf16> -> vector<32x256xbf16>
    %c0_70 = arith.constant 0 : index
    %c0_71 = arith.constant 0 : index
    %c12 = arith.constant 12 : index
    %63 = vector.load %arg9[%c0_70, %c0_71, %c12] : memref<2x32x140xbf16, #tpu.memory_space<vmem>>, vector<1x32x128xbf16>
    %64 = vector.shape_cast %63 : vector<1x32x128xbf16> to vector<32x128xbf16>
    %c1_72 = arith.constant 1 : index
    %c0_73 = arith.constant 0 : index
    %c12_74 = arith.constant 12 : index
    %65 = vector.load %arg9[%c1_72, %c0_73, %c12_74] : memref<2x32x140xbf16, #tpu.memory_space<vmem>>, vector<1x32x128xbf16>
    %66 = vector.shape_cast %65 : vector<1x32x128xbf16> to vector<32x128xbf16>
    %67 = tpu.concatenate %64, %66 in 1 : vector<32x128xbf16>, vector<32x128xbf16> -> vector<32x256xbf16>
    %68 = tpu.concatenate %37, %42, %47, %52, %57, %62, %67 in 0 : vector<32x256xbf16>, vector<32x256xbf16>, vector<32x256xbf16>, vector<32x256xbf16>, vector<32x256xbf16>, vector<32x256xbf16>, vector<32x256xbf16> -> vector<224x256xbf16>
    %c0_75 = arith.constant 0 : index
    %c0_76 = arith.constant 0 : index
    %69 = vector.load %arg2[%c0_75, %c0_76] : memref<32x224xbf16, #tpu.memory_space<vmem>>, vector<32x224xbf16>
    %cst_77 = arith.constant dense<0.000000e+00> : vector<32x256xf32>
    %70 = tpu.matmul %69, %68, %cst_77 {dimension_numbers = #tpu.dot_dimension_numbers<[1], [0], [0], [1], [0, 0, 1, 1], [], []>} : vector<32x224xbf16>, vector<224x256xbf16>, vector<32x256xf32> -> vector<32x256xf32>
    %71 = vector.broadcast %0 : vector<32x1xf32> to vector<32x256xf32>
    %72 = arith.mulf %70, %71 : vector<32x256xf32>
    %73 = vector.broadcast %1 : vector<32x1xf32> to vector<32x256xf32>
    %74 = arith.addf %72, %73 : vector<32x256xf32>
    %cst_78 = arith.constant 0.000000e+00 : f32
    %75 = vector.broadcast %cst_78 : f32 to vector<32x256xf32>
    %76 = arith.maximumf %74, %75 : vector<32x256xf32>
    %77 = vector.extract_strided_slice %76 {offsets = [0, 0], sizes = [32, 128], strides = [1, 1]} : vector<32x256xf32> to vector<32x128xf32>
    %78 = arith.truncf %77 : vector<32x128xf32> to vector<32x128xbf16>
    %c0_79 = arith.constant 0 : index
    %c0_80 = arith.constant 0 : index
    %c6_81 = arith.constant 6 : index
    %79 = vector.load %arg9[%c0_79, %c0_80, %c6_81] : memref<2x32x140xbf16, #tpu.memory_space<vmem>>, vector<1x32x128xbf16>
    %80 = vector.shape_cast %79 : vector<1x32x128xbf16> to vector<32x128xbf16>
    %81 = vector.shape_cast %78 : vector<32x128xbf16> to vector<1x32x128xbf16>
    tpu.vector_store %arg9[%c0_79, %c0_80, %c6_81], %81 {strides = array<i32>} : memref<2x32x140xbf16, #tpu.memory_space<vmem>>, vector<1x32x128xbf16>,
    %82 = vector.extract_strided_slice %76 {offsets = [0, 128], sizes = [32, 128], strides = [1, 1]} : vector<32x256xf32> to vector<32x128xf32>
    %83 = arith.truncf %82 : vector<32x128xf32> to vector<32x128xbf16>
    %c1_82 = arith.constant 1 : index
    %c0_83 = arith.constant 0 : index
    %c6_84 = arith.constant 6 : index
    %84 = vector.load %arg9[%c1_82, %c0_83, %c6_84] : memref<2x32x140xbf16, #tpu.memory_space<vmem>>, vector<1x32x128xbf16>
    %85 = vector.shape_cast %84 : vector<1x32x128xbf16> to vector<32x128xbf16>
    %86 = vector.shape_cast %83 : vector<32x128xbf16> to vector<1x32x128xbf16>
    tpu.vector_store %arg9[%c1_82, %c0_83, %c6_84], %86 {strides = array<i32>} : memref<2x32x140xbf16, #tpu.memory_space<vmem>>, vector<1x32x128xbf16>,
    %c0_85 = arith.constant 0 : index
    %c0_86 = arith.constant 0 : index
    %c0_87 = arith.constant 0 : index
    %87 = vector.load %arg9[%c0_85, %c0_86, %c0_87] : memref<2x32x140xbf16, #tpu.memory_space<vmem>>, vector<1x32x128xbf16>
    %88 = vector.shape_cast %87 : vector<1x32x128xbf16> to vector<32x128xbf16>
    %c1_88 = arith.constant 1 : index
    %c0_89 = arith.constant 0 : index
    %c0_90 = arith.constant 0 : index
    %89 = vector.load %arg9[%c1_88, %c0_89, %c0_90] : memref<2x32x140xbf16, #tpu.memory_space<vmem>>, vector<1x32x128xbf16>
    %90 = vector.shape_cast %89 : vector<1x32x128xbf16> to vector<32x128xbf16>
    %91 = tpu.concatenate %88, %90 in 1 : vector<32x128xbf16>, vector<32x128xbf16> -> vector<32x256xbf16>
    %c0_91 = arith.constant 0 : index
    %c0_92 = arith.constant 0 : index
    %c2_93 = arith.constant 2 : index
    %92 = vector.load %arg9[%c0_91, %c0_92, %c2_93] : memref<2x32x140xbf16, #tpu.memory_space<vmem>>, vector<1x32x128xbf16>
    %93 = vector.shape_cast %92 : vector<1x32x128xbf16> to vector<32x128xbf16>
    %c1_94 = arith.constant 1 : index
    %c0_95 = arith.constant 0 : index
    %c2_96 = arith.constant 2 : index
    %94 = vector.load %arg9[%c1_94, %c0_95, %c2_96] : memref<2x32x140xbf16, #tpu.memory_space<vmem>>, vector<1x32x128xbf16>
    %95 = vector.shape_cast %94 : vector<1x32x128xbf16> to vector<32x128xbf16>
    %96 = tpu.concatenate %93, %95 in 1 : vector<32x128xbf16>, vector<32x128xbf16> -> vector<32x256xbf16>
    %c0_97 = arith.constant 0 : index
    %c0_98 = arith.constant 0 : index
    %c4_99 = arith.constant 4 : index
    %97 = vector.load %arg9[%c0_97, %c0_98, %c4_99] : memref<2x32x140xbf16, #tpu.memory_space<vmem>>, vector<1x32x128xbf16>
    %98 = vector.shape_cast %97 : vector<1x32x128xbf16> to vector<32x128xbf16>
    %c1_100 = arith.constant 1 : index
    %c0_101 = arith.constant 0 : index
    %c4_102 = arith.constant 4 : index
    %99 = vector.load %arg9[%c1_100, %c0_101, %c4_102] : memref<2x32x140xbf16, #tpu.memory_space<vmem>>, vector<1x32x128xbf16>
    %100 = vector.shape_cast %99 : vector<1x32x128xbf16> to vector<32x128xbf16>
    %101 = tpu.concatenate %98, %100 in 1 : vector<32x128xbf16>, vector<32x128xbf16> -> vector<32x256xbf16>
    %c0_103 = arith.constant 0 : index
    %c0_104 = arith.constant 0 : index
    %c6_105 = arith.constant 6 : index
    %102 = vector.load %arg9[%c0_103, %c0_104, %c6_105] : memref<2x32x140xbf16, #tpu.memory_space<vmem>>, vector<1x32x128xbf16>
    %103 = vector.shape_cast %102 : vector<1x32x128xbf16> to vector<32x128xbf16>
    %c1_106 = arith.constant 1 : index
    %c0_107 = arith.constant 0 : index
    %c6_108 = arith.constant 6 : index
    %104 = vector.load %arg9[%c1_106, %c0_107, %c6_108] : memref<2x32x140xbf16, #tpu.memory_space<vmem>>, vector<1x32x128xbf16>
    %105 = vector.shape_cast %104 : vector<1x32x128xbf16> to vector<32x128xbf16>
    %106 = tpu.concatenate %103, %105 in 1 : vector<32x128xbf16>, vector<32x128xbf16> -> vector<32x256xbf16>
    %c0_109 = arith.constant 0 : index
    %c0_110 = arith.constant 0 : index
    %c8_111 = arith.constant 8 : index
    %107 = vector.load %arg9[%c0_109, %c0_110, %c8_111] : memref<2x32x140xbf16, #tpu.memory_space<vmem>>, vector<1x32x128xbf16>
    %108 = vector.shape_cast %107 : vector<1x32x128xbf16> to vector<32x128xbf16>
    %c1_112 = arith.constant 1 : index
    %c0_113 = arith.constant 0 : index
    %c8_114 = arith.constant 8 : index
    %109 = vector.load %arg9[%c1_112, %c0_113, %c8_114] : memref<2x32x140xbf16, #tpu.memory_space<vmem>>, vector<1x32x128xbf16>
    %110 = vector.shape_cast %109 : vector<1x32x128xbf16> to vector<32x128xbf16>
    %111 = tpu.concatenate %108, %110 in 1 : vector<32x128xbf16>, vector<32x128xbf16> -> vector<32x256xbf16>
    %c0_115 = arith.constant 0 : index
    %c0_116 = arith.constant 0 : index
    %c10_117 = arith.constant 10 : index
    %112 = vector.load %arg9[%c0_115, %c0_116, %c10_117] : memref<2x32x140xbf16, #tpu.memory_space<vmem>>, vector<1x32x128xbf16>
    %113 = vector.shape_cast %112 : vector<1x32x128xbf16> to vector<32x128xbf16>
    %c1_118 = arith.constant 1 : index
    %c0_119 = arith.constant 0 : index
    %c10_120 = arith.constant 10 : index
    %114 = vector.load %arg9[%c1_118, %c0_119, %c10_120] : memref<2x32x140xbf16, #tpu.memory_space<vmem>>, vector<1x32x128xbf16>
    %115 = vector.shape_cast %114 : vector<1x32x128xbf16> to vector<32x128xbf16>
    %116 = tpu.concatenate %113, %115 in 1 : vector<32x128xbf16>, vector<32x128xbf16> -> vector<32x256xbf16>
    %c0_121 = arith.constant 0 : index
    %c0_122 = arith.constant 0 : index
    %c12_123 = arith.constant 12 : index
    %117 = vector.load %arg9[%c0_121, %c0_122, %c12_123] : memref<2x32x140xbf16, #tpu.memory_space<vmem>>, vector<1x32x128xbf16>
    %118 = vector.shape_cast %117 : vector<1x32x128xbf16> to vector<32x128xbf16>
    %c1_124 = arith.constant 1 : index
    %c0_125 = arith.constant 0 : index
    %c12_126 = arith.constant 12 : index
    %119 = vector.load %arg9[%c1_124, %c0_125, %c12_126] : memref<2x32x140xbf16, #tpu.memory_space<vmem>>, vector<1x32x128xbf16>
    %120 = vector.shape_cast %119 : vector<1x32x128xbf16> to vector<32x128xbf16>
    %121 = tpu.concatenate %118, %120 in 1 : vector<32x128xbf16>, vector<32x128xbf16> -> vector<32x256xbf16>
    %122 = tpu.concatenate %91, %96, %101, %106, %111, %116, %121 in 0 : vector<32x256xbf16>, vector<32x256xbf16>, vector<32x256xbf16>, vector<32x256xbf16>, vector<32x256xbf16>, vector<32x256xbf16>, vector<32x256xbf16> -> vector<224x256xbf16>
    %c0_127 = arith.constant 0 : index
    %c0_128 = arith.constant 0 : index
    %123 = vector.load %arg3[%c0_127, %c0_128] : memref<32x224xbf16, #tpu.memory_space<vmem>>, vector<32x224xbf16>
    %cst_129 = arith.constant dense<0.000000e+00> : vector<32x256xf32>
    %124 = tpu.matmul %123, %122, %cst_129 {dimension_numbers = #tpu.dot_dimension_numbers<[1], [0], [0], [1], [0, 0, 1, 1], [], []>} : vector<32x224xbf16>, vector<224x256xbf16>, vector<32x256xf32> -> vector<32x256xf32>
    %125 = vector.broadcast %2 : vector<32x1xf32> to vector<32x256xf32>
    %126 = arith.mulf %124, %125 : vector<32x256xf32>
    %127 = vector.broadcast %3 : vector<32x1xf32> to vector<32x256xf32>
    %128 = arith.addf %126, %127 : vector<32x256xf32>
    %129 = vector.extract_strided_slice %128 {offsets = [0, 0], sizes = [32, 128], strides = [1, 1]} : vector<32x256xf32> to vector<32x128xf32>
    %130 = vector.broadcast %4 : vector<32x1xf32> to vector<32x128xf32>
    %131 = arith.mulf %129, %130 : vector<32x128xf32>
    %cst_130 = arith.constant dense<0.000000e+00> : vector<128xf32>
    %132 = vector.multi_reduction <add>, %131, %cst_130 [0] : vector<32x128xf32> to vector<128xf32>
    %133 = vector.shape_cast %132 : vector<128xf32> to vector<1x128xf32>
    %134 = vector.broadcast %9 : vector<1x1xf32> to vector<1x128xf32>
    %135 = arith.addf %133, %134 : vector<1x128xf32>
    %cst_131 = arith.constant dense<0xFF800000> : vector<1xf32>
    %136 = vector.multi_reduction <maximumf>, %135, %cst_131 [1] : vector<1x128xf32> to vector<1xf32>
    %137 = vector.shape_cast %136 : vector<1xf32> to vector<1x1xf32>
    %138 = vector.broadcast %137 : vector<1x1xf32> to vector<1x128xf32>
    %139 = arith.subf %135, %138 : vector<1x128xf32>
    %140 = math.exp %139 : vector<1x128xf32>
    %cst_132 = arith.constant dense<0.000000e+00> : vector<1xf32>
    %141 = vector.multi_reduction <add>, %140, %cst_132 [1] : vector<1x128xf32> to vector<1xf32>
    %142 = vector.shape_cast %141 : vector<1xf32> to vector<1x1xf32>
    %143 = vector.broadcast %142 : vector<1x1xf32> to vector<1x128xf32>
    %144 = arith.divf %140, %143 : vector<1x128xf32>
    %145 = vector.broadcast %144 : vector<1x128xf32> to vector<32x128xf32>
    %146 = arith.mulf %129, %145 : vector<32x128xf32>
    %cst_133 = arith.constant dense<0.000000e+00> : vector<32xf32>
    %147 = vector.multi_reduction <add>, %146, %cst_133 [1] : vector<32x128xf32> to vector<32xf32>
    %148 = vector.shape_cast %147 : vector<32xf32> to vector<32x1xf32>
    %c0_134 = arith.constant 0 : index
    %c0_135 = arith.constant 0 : index
    %149 = vector.load %arg5[%c0_134, %c0_135] : memref<2x32xf32, #tpu.memory_space<vmem>>, vector<2x32xf32>
    %cst_136 = arith.constant dense<0.000000e+00> : vector<2x1xf32>
    %150 = tpu.matmul %149, %148, %cst_136 {dimension_numbers = #tpu.dot_dimension_numbers<[1], [0], [0], [1], [0, 0, 1, 1], [], []>} : vector<2x32xf32>, vector<32x1xf32>, vector<2x1xf32> -> vector<2x1xf32>
    %151 = arith.addf %150, %6 : vector<2x1xf32>
    %cst_137 = arith.constant dense<0.000000e+00> : vector<1xf32>
    %152 = vector.multi_reduction <add>, %151, %cst_137 [0] : vector<2x1xf32> to vector<1xf32>
    %153 = vector.shape_cast %152 : vector<1xf32> to vector<1x1xf32>
    %cst_138 = arith.constant 2.000000e+00 : f32
    %154 = vector.broadcast %cst_138 : f32 to vector<1x1xf32>
    %155 = arith.divf %153, %154 : vector<1x1xf32>
    %156 = vector.broadcast %155 : vector<1x1xf32> to vector<2x1xf32>
    %157 = arith.subf %151, %156 : vector<2x1xf32>
    %158 = arith.mulf %157, %157 : vector<2x1xf32>
    %cst_139 = arith.constant dense<0.000000e+00> : vector<1xf32>
    %159 = vector.multi_reduction <add>, %158, %cst_139 [0] : vector<2x1xf32> to vector<1xf32>
    %160 = vector.shape_cast %159 : vector<1xf32> to vector<1x1xf32>
    %cst_140 = arith.constant 2.000000e+00 : f32
    %161 = vector.broadcast %cst_140 : f32 to vector<1x1xf32>
    %162 = arith.divf %160, %161 : vector<1x1xf32>
    %163 = vector.broadcast %155 : vector<1x1xf32> to vector<2x1xf32>
    %164 = arith.subf %151, %163 : vector<2x1xf32>
    %cst_141 = arith.constant 9.99999974E-6 : f32
    %165 = vector.broadcast %cst_141 : f32 to vector<1x1xf32>
    %166 = arith.addf %162, %165 : vector<1x1xf32>
    %167 = math.rsqrt %166 : vector<1x1xf32>
    %168 = vector.broadcast %167 : vector<1x1xf32> to vector<2x1xf32>
    %169 = arith.mulf %164, %168 : vector<2x1xf32>
    %170 = arith.mulf %169, %7 : vector<2x1xf32>
    %171 = arith.addf %170, %8 : vector<2x1xf32>
    %cst_142 = arith.constant 0.000000e+00 : f32
    %172 = vector.broadcast %cst_142 : f32 to vector<2x1xf32>
    %173 = arith.maximumf %171, %172 : vector<2x1xf32>
    %c0_143 = arith.constant 0 : index
    %c0_144 = arith.constant 0 : index
    %174 = vector.load %arg6[%c0_143, %c0_144] : memref<32x2xf32, #tpu.memory_space<vmem>>, vector<32x2xf32>
    %cst_145 = arith.constant dense<0.000000e+00> : vector<32x1xf32>
    %175 = tpu.matmul %174, %173, %cst_145 {dimension_numbers = #tpu.dot_dimension_numbers<[1], [0], [0], [1], [0, 0, 1, 1], [], []>} : vector<32x2xf32>, vector<2x1xf32>, vector<32x1xf32> -> vector<32x1xf32>
    %176 = arith.addf %175, %5 : vector<32x1xf32>
    %177 = arith.negf %176 : vector<32x1xf32>
    %178 = math.exp %177 : vector<32x1xf32>
    %cst_146 = arith.constant 1.000000e+00 : f32
    %179 = vector.broadcast %cst_146 : f32 to vector<32x1xf32>
    %180 = arith.addf %179, %178 : vector<32x1xf32>
    %181 = arith.divf %179, %180 : vector<32x1xf32>
    %182 = vector.broadcast %181 : vector<32x1xf32> to vector<32x128xf32>
    %183 = arith.mulf %129, %182 : vector<32x128xf32>
    %c0_147 = arith.constant 0 : index
    %c0_148 = arith.constant 0 : index
    %c0_149 = arith.constant 0 : index
    %184 = vector.load %arg1[%c0_147, %c0_148, %c0_149] : memref<2x32x128xbf16, #tpu.memory_space<vmem>>, vector<1x32x128xbf16>
    %185 = vector.shape_cast %184 : vector<1x32x128xbf16> to vector<32x128xbf16>
    %186 = arith.extf %185 : vector<32x128xbf16> to vector<32x128xf32>
    %187 = arith.addf %183, %186 : vector<32x128xf32>
    %cst_150 = arith.constant 0.000000e+00 : f32
    %188 = vector.broadcast %cst_150 : f32 to vector<32x128xf32>
    %189 = arith.maximumf %187, %188 : vector<32x128xf32>
    %190 = arith.truncf %189 : vector<32x128xf32> to vector<32x128xbf16>
    %c0_151 = arith.constant 0 : index
    %c0_152 = arith.constant 0 : index
    %c0_153 = arith.constant 0 : index
    %191 = vector.load %arg8[%c0_151, %c0_152, %c0_153] : memref<2x32x128xbf16, #tpu.memory_space<vmem>>, vector<1x32x128xbf16>
    %192 = vector.shape_cast %191 : vector<1x32x128xbf16> to vector<32x128xbf16>
    %193 = vector.shape_cast %190 : vector<32x128xbf16> to vector<1x32x128xbf16>
    tpu.vector_store %arg8[%c0_151, %c0_152, %c0_153], %193 {strides = array<i32>} : memref<2x32x128xbf16, #tpu.memory_space<vmem>>, vector<1x32x128xbf16>,
    %194 = vector.extract_strided_slice %128 {offsets = [0, 128], sizes = [32, 128], strides = [1, 1]} : vector<32x256xf32> to vector<32x128xf32>
    %195 = vector.broadcast %4 : vector<32x1xf32> to vector<32x128xf32>
    %196 = arith.mulf %194, %195 : vector<32x128xf32>
    %cst_154 = arith.constant dense<0.000000e+00> : vector<128xf32>
    %197 = vector.multi_reduction <add>, %196, %cst_154 [0] : vector<32x128xf32> to vector<128xf32>
    %198 = vector.shape_cast %197 : vector<128xf32> to vector<1x128xf32>
    %199 = vector.broadcast %9 : vector<1x1xf32> to vector<1x128xf32>
    %200 = arith.addf %198, %199 : vector<1x128xf32>
    %cst_155 = arith.constant dense<0xFF800000> : vector<1xf32>
    %201 = vector.multi_reduction <maximumf>, %200, %cst_155 [1] : vector<1x128xf32> to vector<1xf32>
    %202 = vector.shape_cast %201 : vector<1xf32> to vector<1x1xf32>
    %203 = vector.broadcast %202 : vector<1x1xf32> to vector<1x128xf32>
    %204 = arith.subf %200, %203 : vector<1x128xf32>
    %205 = math.exp %204 : vector<1x128xf32>
    %cst_156 = arith.constant dense<0.000000e+00> : vector<1xf32>
    %206 = vector.multi_reduction <add>, %205, %cst_156 [1] : vector<1x128xf32> to vector<1xf32>
    %207 = vector.shape_cast %206 : vector<1xf32> to vector<1x1xf32>
    %208 = vector.broadcast %207 : vector<1x1xf32> to vector<1x128xf32>
    %209 = arith.divf %205, %208 : vector<1x128xf32>
    %210 = vector.broadcast %209 : vector<1x128xf32> to vector<32x128xf32>
    %211 = arith.mulf %194, %210 : vector<32x128xf32>
    %cst_157 = arith.constant dense<0.000000e+00> : vector<32xf32>
    %212 = vector.multi_reduction <add>, %211, %cst_157 [1] : vector<32x128xf32> to vector<32xf32>
    %213 = vector.shape_cast %212 : vector<32xf32> to vector<32x1xf32>
    %c0_158 = arith.constant 0 : index
    %c0_159 = arith.constant 0 : index
    %214 = vector.load %arg5[%c0_158, %c0_159] : memref<2x32xf32, #tpu.memory_space<vmem>>, vector<2x32xf32>
    %cst_160 = arith.constant dense<0.000000e+00> : vector<2x1xf32>
    %215 = tpu.matmul %214, %213, %cst_160 {dimension_numbers = #tpu.dot_dimension_numbers<[1], [0], [0], [1], [0, 0, 1, 1], [], []>} : vector<2x32xf32>, vector<32x1xf32>, vector<2x1xf32> -> vector<2x1xf32>
    %216 = arith.addf %215, %6 : vector<2x1xf32>
    %cst_161 = arith.constant dense<0.000000e+00> : vector<1xf32>
    %217 = vector.multi_reduction <add>, %216, %cst_161 [0] : vector<2x1xf32> to vector<1xf32>
    %218 = vector.shape_cast %217 : vector<1xf32> to vector<1x1xf32>
    %cst_162 = arith.constant 2.000000e+00 : f32
    %219 = vector.broadcast %cst_162 : f32 to vector<1x1xf32>
    %220 = arith.divf %218, %219 : vector<1x1xf32>
    %221 = vector.broadcast %220 : vector<1x1xf32> to vector<2x1xf32>
    %222 = arith.subf %216, %221 : vector<2x1xf32>
    %223 = arith.mulf %222, %222 : vector<2x1xf32>
    %cst_163 = arith.constant dense<0.000000e+00> : vector<1xf32>
    %224 = vector.multi_reduction <add>, %223, %cst_163 [0] : vector<2x1xf32> to vector<1xf32>
    %225 = vector.shape_cast %224 : vector<1xf32> to vector<1x1xf32>
    %cst_164 = arith.constant 2.000000e+00 : f32
    %226 = vector.broadcast %cst_164 : f32 to vector<1x1xf32>
    %227 = arith.divf %225, %226 : vector<1x1xf32>
    %228 = vector.broadcast %220 : vector<1x1xf32> to vector<2x1xf32>
    %229 = arith.subf %216, %228 : vector<2x1xf32>
    %cst_165 = arith.constant 9.99999974E-6 : f32
    %230 = vector.broadcast %cst_165 : f32 to vector<1x1xf32>
    %231 = arith.addf %227, %230 : vector<1x1xf32>
    %232 = math.rsqrt %231 : vector<1x1xf32>
    %233 = vector.broadcast %232 : vector<1x1xf32> to vector<2x1xf32>
    %234 = arith.mulf %229, %233 : vector<2x1xf32>
    %235 = arith.mulf %234, %7 : vector<2x1xf32>
    %236 = arith.addf %235, %8 : vector<2x1xf32>
    %cst_166 = arith.constant 0.000000e+00 : f32
    %237 = vector.broadcast %cst_166 : f32 to vector<2x1xf32>
    %238 = arith.maximumf %236, %237 : vector<2x1xf32>
    %c0_167 = arith.constant 0 : index
    %c0_168 = arith.constant 0 : index
    %239 = vector.load %arg6[%c0_167, %c0_168] : memref<32x2xf32, #tpu.memory_space<vmem>>, vector<32x2xf32>
    %cst_169 = arith.constant dense<0.000000e+00> : vector<32x1xf32>
    %240 = tpu.matmul %239, %238, %cst_169 {dimension_numbers = #tpu.dot_dimension_numbers<[1], [0], [0], [1], [0, 0, 1, 1], [], []>} : vector<32x2xf32>, vector<2x1xf32>, vector<32x1xf32> -> vector<32x1xf32>
    %241 = arith.addf %240, %5 : vector<32x1xf32>
    %242 = arith.negf %241 : vector<32x1xf32>
    %243 = math.exp %242 : vector<32x1xf32>
    %cst_170 = arith.constant 1.000000e+00 : f32
    %244 = vector.broadcast %cst_170 : f32 to vector<32x1xf32>
    %245 = arith.addf %244, %243 : vector<32x1xf32>
    %246 = arith.divf %244, %245 : vector<32x1xf32>
    %247 = vector.broadcast %246 : vector<32x1xf32> to vector<32x128xf32>
    %248 = arith.mulf %194, %247 : vector<32x128xf32>
    %c1_171 = arith.constant 1 : index
    %c0_172 = arith.constant 0 : index
    %c0_173 = arith.constant 0 : index
    %249 = vector.load %arg1[%c1_171, %c0_172, %c0_173] : memref<2x32x128xbf16, #tpu.memory_space<vmem>>, vector<1x32x128xbf16>
    %250 = vector.shape_cast %249 : vector<1x32x128xbf16> to vector<32x128xbf16>
    %251 = arith.extf %250 : vector<32x128xbf16> to vector<32x128xf32>
    %252 = arith.addf %248, %251 : vector<32x128xf32>
    %cst_174 = arith.constant 0.000000e+00 : f32
    %253 = vector.broadcast %cst_174 : f32 to vector<32x128xf32>
    %254 = arith.maximumf %252, %253 : vector<32x128xf32>
    %255 = arith.truncf %254 : vector<32x128xf32> to vector<32x128xbf16>
    %c1_175 = arith.constant 1 : index
    %c0_176 = arith.constant 0 : index
    %c0_177 = arith.constant 0 : index
    %256 = vector.load %arg8[%c1_175, %c0_176, %c0_177] : memref<2x32x128xbf16, #tpu.memory_space<vmem>>, vector<1x32x128xbf16>
    %257 = vector.shape_cast %256 : vector<1x32x128xbf16> to vector<32x128xbf16>
    %258 = vector.shape_cast %255 : vector<32x128xbf16> to vector<1x32x128xbf16>
    tpu.vector_store %arg8[%c1_175, %c0_176, %c0_177], %258 {strides = array<i32>} : memref<2x32x128xbf16, #tpu.memory_space<vmem>>, vector<1x32x128xbf16>,
    return
  }
  func.func @transform_0(%arg0: i32) -> (i32, i32, i32) {
    %c0_i32 = arith.constant 0 : i32
    %c0_i32_0 = arith.constant 0 : i32
    %c0_i32_1 = arith.constant 0 : i32
    return %arg0, %c0_i32, %c0_i32_0 : i32, i32, i32
  }
  func.func @transform_1(%arg0: i32) -> (i32, i32) {
    %c0_i32 = arith.constant 0 : i32
    %c0_i32_0 = arith.constant 0 : i32
    %c0_i32_1 = arith.constant 0 : i32
    return %c0_i32, %c0_i32_0 : i32, i32
  }
  func.func @transform_2(%arg0: i32) -> (i32, i32) {
    %c0_i32 = arith.constant 0 : i32
    %c0_i32_0 = arith.constant 0 : i32
    %c0_i32_1 = arith.constant 0 : i32
    return %c0_i32, %c0_i32_0 : i32, i32
  }
  func.func @transform_3(%arg0: i32) -> (i32, i32) {
    %c0_i32 = arith.constant 0 : i32
    %c0_i32_0 = arith.constant 0 : i32
    %c0_i32_1 = arith.constant 0 : i32
    return %c0_i32, %c0_i32_0 : i32, i32
  }
  func.func @transform_4(%arg0: i32) -> (i32, i32) {
    %c0_i32 = arith.constant 0 : i32
    %c0_i32_0 = arith.constant 0 : i32
    %c0_i32_1 = arith.constant 0 : i32
    return %c0_i32, %c0_i32_0 : i32, i32
  }
  func.func @transform_5(%arg0: i32) -> (i32, i32) {
    %c0_i32 = arith.constant 0 : i32
    %c0_i32_0 = arith.constant 0 : i32
    %c0_i32_1 = arith.constant 0 : i32
    return %c0_i32, %c0_i32_0 : i32, i32
  }
  func.func @transform_6(%arg0: i32) -> (i32, i32) {
    %c0_i32 = arith.constant 0 : i32
    %c0_i32_0 = arith.constant 0 : i32
    %c0_i32_1 = arith.constant 0 : i32
    return %c0_i32, %c0_i32_0 : i32, i32
  }
  func.func @transform_7(%arg0: i32) -> (i32, i32, i32) {
    %c0_i32 = arith.constant 0 : i32
    %c0_i32_0 = arith.constant 0 : i32
    %c0_i32_1 = arith.constant 0 : i32
    return %arg0, %c0_i32, %c0_i32_0 : i32, i32, i32
  }
}

</mosaic_0001>

<llo_original>
// kernel: residual_block_pallas.1
$region0: #{residual_block_pallas.1}
  #allocation0 [shape = 'u32[]', space=smem, size = 0x4, offset = 0x4, fixed_abs, tag = 'smem constant byte address 0x4 - core index']
  #allocation1 [shape = 'u32[144,128]{1,0:T(1,128)}', space=vmem, size = 0x12000, scoped, tag = 'internal scratch']
  #allocation2 [shape = 'bf16[2,32,140]{2,1,0:T(16,128)(2,1)}', space=vmem, size = 0x8000, scoped, tag = 'scratch operand']
  %s0 = inlined_call_operand.vmem [shape: bf16[2,32,128], index: 0, kind: input, shape index: {}]
  %s1 = inlined_call_operand.vmem [shape: bf16[32,224], index: 1, kind: input, shape index: {}]
  %s2 = inlined_call_operand.vmem [shape: bf16[32,224], index: 2, kind: input, shape index: {}]
  %s3 = inlined_call_operand.vmem [shape: f32[32,6], index: 3, kind: input, shape index: {}]
  %s4 = inlined_call_operand.vmem [shape: f32[2,32], index: 4, kind: input, shape index: {}]
  %s5 = inlined_call_operand.vmem [shape: f32[32,2], index: 5, kind: input, shape index: {}]
  %s6 = inlined_call_operand.vmem [shape: f32[2,4], index: 6, kind: input, shape index: {}]
  %s7 = inlined_call_operand.hbm [shape: bf16[2,32,128], index: 7, kind: output, shape index: {}]
  %s8 = sld [smem:[#allocation0]]
  $region38: #{residual_block_pallas.1} parent=0
    _
  %s10 = ssub.s32 1, %s8
  %s11 = scalar_select 0, %s10, %s8
  $region1: #{residual_block_pallas.1} parent=0
    #allocation3 [shape = 'u8[16384]{0}', space=vmem, size = 0x4000, scoped, tag = 'output window, operand 0, single buffered']
    #allocation4 [shape = 's32[1]{0}', space=sflag, size = 0x4, scoped, tag = 'scoped memory for residual_block_pallas.1']
    %12 = vsyncpa [#allocation4], 0
    // Predicated region
    $region2: #{residual_block_pallas.1} parent=1 // pred_check
      _
    $region3: #{residual_block_pallas.1} parent=1 // pred_check_branch
      %14 = sbr.rel (0) target = $region5
    $region4: #{residual_block_pallas.1} parent=1 // pred_region
      _
    $region5: #{residual_block_pallas.1} parent=1 // pred_fallthru
      _
    // Predicated region
    $region6: #{residual_block_pallas.1} parent=1 // pred_check
      _
    $region7: #{residual_block_pallas.1} parent=1 // pred_check_branch
      %16 = sbr.rel (0) target = $region9
    $region8: #{residual_block_pallas.1} parent=1 // pred_region
      _
    $region9: #{residual_block_pallas.1} parent=1 // pred_fallthru
      _
    // Predicated region
    $region10: #{residual_block_pallas.1} parent=1 // pred_check
      _
    $region11: #{residual_block_pallas.1} parent=1 // pred_check_branch
      %18 = sbr.rel (0) target = $region13
    $region12: #{residual_block_pallas.1} parent=1 // pred_region
      _
    $region13: #{residual_block_pallas.1} parent=1 // pred_fallthru
      _
    // Predicated region
    $region14: #{residual_block_pallas.1} parent=1 // pred_check
      _
    $region15: #{residual_block_pallas.1} parent=1 // pred_check_branch
      %20 = sbr.rel (0) target = $region17
    $region16: #{residual_block_pallas.1} parent=1 // pred_region
      _
    $region17: #{residual_block_pallas.1} parent=1 // pred_fallthru
      _
    // Predicated region
    $region18: #{residual_block_pallas.1} parent=1 // pred_check
      _
    $region19: #{residual_block_pallas.1} parent=1 // pred_check_branch
      %22 = sbr.rel (0) target = $region21
    $region20: #{residual_block_pallas.1} parent=1 // pred_region
      _
    $region21: #{residual_block_pallas.1} parent=1 // pred_fallthru
      _
    // Predicated region
    $region22: #{residual_block_pallas.1} parent=1 // pred_check
      _
    $region23: #{residual_block_pallas.1} parent=1 // pred_check_branch
      %24 = sbr.rel (0) target = $region25
    $region24: #{residual_block_pallas.1} parent=1 // pred_region
      _
    $region25: #{residual_block_pallas.1} parent=1 // pred_fallthru
      _
    // Predicated region
    $region26: #{residual_block_pallas.1} parent=1 // pred_check
      _
    $region27: #{residual_block_pallas.1} parent=1 // pred_check_branch
      %26 = sbr.rel (0) target = $region29
    $region28: #{residual_block_pallas.1} parent=1 // pred_region
      _
    $region29: #{residual_block_pallas.1} parent=1 // pred_fallthru
      _
    %v28 = vld [vmem:[%s3] sm:$0xff]
    %v29 = vld [vmem:[%s3 + $0x8] sm:$0xff]
    %v30 = vld [vmem:[%s3 + $0x10] sm:$0xff]
    %v31 = vld [vmem:[%s3 + $0x18] sm:$0xff]
    %v32 = vld [vmem:[%s6] sm:$0x3]
    %v33 = vld [vmem:[%s6] sm:$0x1]
    %vm34 = vcmask 48128
    %35 = vst.msk [vmem:[#allocation2] sm:$0xff] %vm34, 0
    %36 = vst.msk [vmem:[#allocation2 + $0x10] sm:$0xff] %vm34, 0
    %vm37 = vcmask 97328
    %38 = vst.msk [vmem:[#allocation2 + $0x8] sm:$0xff] %vm37, 0
    %39 = vst.msk [vmem:[#allocation2 + $0x18] sm:$0xff] %vm37, 0
    %s40 = scalar_lea.vmem [#allocation2], 32
    %41 = vst.msk [vmem:[%s40] sm:$0xff] %vm34, 0
    %42 = vst.msk [vmem:[%s40 + $0x10] sm:$0xff] %vm34, 0
    %43 = vst.msk [vmem:[%s40 + $0x8] sm:$0xff] %vm37, 0
    %44 = vst.msk [vmem:[%s40 + $0x18] sm:$0xff] %vm37, 0
    %v45 = vld [vmem:[%s0] sm:$0xf]
    %v46 = vld [vmem:[%s0 + $0x4] sm:$0xf]
    %v47 = vld [vmem:[%s0 + $0x8] sm:$0xf]
    %v48 = vld [vmem:[%s0 + $0xc] sm:$0xf]
    %v53 = vunpack.c.l.b16 %v45
    %v54 = vunpack.c.l.b16 %v46
    %v55 = vunpack.c.l.b16 %v47
    %v56 = vunpack.c.l.b16 %v48
    %v57 = vpack.c.b16 %v54, %v53
    %v58 = vpack.c.b16 %v56, %v55
    %59 = vrot.lane.b32.xlu0 %v57, 6
    %v60 = vpop.permute.xlu0 %59
    %61 = vrot.lane.b32.xlu0 %v58, 6
    %v62 = vpop.permute.xlu0 %61
    %vm65 = vcmask 1047600
    %66 = vst.msk [vmem:[#allocation2] sm:$0xff] %vm65, %v60
    %67 = vst.msk [vmem:[#allocation2 + $0x8] sm:$0xff] %vm34, %v60
    %68 = vst.msk [vmem:[#allocation2 + $0x10] sm:$0xff] %vm65, %v62
    %69 = vst.msk [vmem:[#allocation2 + $0x18] sm:$0xff] %vm34, %v62
    %s70 = scalar_lea.vmem %s0, 16
    %v71 = vld [vmem:[%s70] sm:$0xf]
    %v72 = vld [vmem:[%s70 + $0x4] sm:$0xf]
    %v73 = vld [vmem:[%s70 + $0x8] sm:$0xf]
    %v74 = vld [vmem:[%s70 + $0xc] sm:$0xf]
    %v79 = vunpack.c.l.b16 %v71
    %v80 = vunpack.c.l.b16 %v72
    %v81 = vunpack.c.l.b16 %v73
    %v82 = vunpack.c.l.b16 %v74
    %v83 = vpack.c.b16 %v80, %v79
    %v84 = vpack.c.b16 %v82, %v81
    %85 = vrot.lane.b32.xlu0 %v83, 6
    %v86 = vpop.permute.xlu0 %85
    %87 = vrot.lane.b32.xlu0 %v84, 6
    %v88 = vpop.permute.xlu0 %87
    %91 = vst.msk [vmem:[%s40] sm:$0xff] %vm65, %v86
    %92 = vst.msk [vmem:[%s40 + $0x8] sm:$0xff] %vm34, %v86
    %93 = vst.msk [vmem:[%s40 + $0x10] sm:$0xff] %vm65, %v88
    %94 = vst.msk [vmem:[%s40 + $0x18] sm:$0xff] %vm34, %v88
    %v95 = vld [vmem:[#allocation2] sm:$0xff]
    %v96 = vld [vmem:[#allocation2 + $0x10] sm:$0xff]
    %v97 = vld [vmem:[%s40] sm:$0xff]
    %v98 = vld [vmem:[%s40 + $0x10] sm:$0xff]
    %v99 = vld [vmem:[#allocation2 + $0x8] sm:$0xff]
    %v100 = vld [vmem:[#allocation2 + $0x18] sm:$0xff]
    %v101 = vld [vmem:[%s40 + $0x8] sm:$0xff]
    %v102 = vld [vmem:[%s40 + $0x18] sm:$0xff]
    %107 = vrot.lane.b32.xlu0 %v95, 126
    %v108 = vpop.permute.xlu0 %107
    %109 = vrot.lane.b32.xlu0 %v99, 126
    %v110 = vpop.permute.xlu0 %109
    %111 = vrot.lane.b32.xlu0 %v96, 126
    %v112 = vpop.permute.xlu0 %111
    %113 = vrot.lane.b32.xlu0 %v100, 126
    %v114 = vpop.permute.xlu0 %113
    %vm115 = vcmask 1031168
    %v116 = vsel %vm115, %v108, %v110
    %v117 = vsel %vm115, %v112, %v114
    %124 = vrot.lane.b32.xlu0 %v97, 126
    %v125 = vpop.permute.xlu0 %124
    %126 = vrot.lane.b32.xlu0 %v101, 126
    %v127 = vpop.permute.xlu0 %126
    %128 = vrot.lane.b32.xlu0 %v98, 126
    %v129 = vpop.permute.xlu0 %128
    %130 = vrot.lane.b32.xlu0 %v102, 126
    %v131 = vpop.permute.xlu0 %130
    %v132 = vsel %vm115, %v125, %v127
    %v133 = vsel %vm115, %v129, %v131
    %136 = vrot.lane.b32.xlu0 %v95, 124
    %v137 = vpop.permute.xlu0 %136
    %138 = vrot.lane.b32.xlu0 %v99, 124
    %v139 = vpop.permute.xlu0 %138
    %140 = vrot.lane.b32.xlu0 %v96, 124
    %v141 = vpop.permute.xlu0 %140
    %142 = vrot.lane.b32.xlu0 %v100, 124
    %v143 = vpop.permute.xlu0 %142
    %vm144 = vcmask 1014784
    %v145 = vsel %vm144, %v137, %v139
    %v146 = vsel %vm144, %v141, %v143
    %149 = vrot.lane.b32.xlu0 %v97, 124
    %v150 = vpop.permute.xlu0 %149
    %151 = vrot.lane.b32.xlu0 %v101, 124
    %v152 = vpop.permute.xlu0 %151
    %153 = vrot.lane.b32.xlu0 %v98, 124
    %v154 = vpop.permute.xlu0 %153
    %155 = vrot.lane.b32.xlu0 %v102, 124
    %v156 = vpop.permute.xlu0 %155
    %v157 = vsel %vm144, %v150, %v152
    %v158 = vsel %vm144, %v154, %v156
    %161 = vrot.lane.b32.xlu0 %v95, 122
    %v162 = vpop.permute.xlu0 %161
    %163 = vrot.lane.b32.xlu0 %v99, 122
    %v164 = vpop.permute.xlu0 %163
    %165 = vrot.lane.b32.xlu0 %v96, 122
    %v166 = vpop.permute.xlu0 %165
    %167 = vrot.lane.b32.xlu0 %v100, 122
    %v168 = vpop.permute.xlu0 %167
    %vm169 = vcmask 998400
    %v170 = vsel %vm169, %v162, %v164
    %v171 = vsel %vm169, %v166, %v168
    %174 = vrot.lane.b32.xlu0 %v97, 122
    %v175 = vpop.permute.xlu0 %174
    %176 = vrot.lane.b32.xlu0 %v101, 122
    %v177 = vpop.permute.xlu0 %176
    %178 = vrot.lane.b32.xlu0 %v98, 122
    %v179 = vpop.permute.xlu0 %178
    %180 = vrot.lane.b32.xlu0 %v102, 122
    %v181 = vpop.permute.xlu0 %180
    %v182 = vsel %vm169, %v175, %v177
    %v183 = vsel %vm169, %v179, %v181
    %186 = vrot.lane.b32.xlu0 %v95, 120
    %v187 = vpop.permute.xlu0 %186
    %188 = vrot.lane.b32.xlu0 %v99, 120
    %v189 = vpop.permute.xlu0 %188
    %190 = vrot.lane.b32.xlu0 %v96, 120
    %v191 = vpop.permute.xlu0 %190
    %192 = vrot.lane.b32.xlu0 %v100, 120
    %v193 = vpop.permute.xlu0 %192
    %vm194 = vcmask 982016
    %v195 = vsel %vm194, %v187, %v189
    %v196 = vsel %vm194, %v191, %v193
    %199 = vrot.lane.b32.xlu0 %v97, 120
    %v200 = vpop.permute.xlu0 %199
    %201 = vrot.lane.b32.xlu0 %v101, 120
    %v202 = vpop.permute.xlu0 %201
    %203 = vrot.lane.b32.xlu0 %v98, 120
    %v204 = vpop.permute.xlu0 %203
    %205 = vrot.lane.b32.xlu0 %v102, 120
    %v206 = vpop.permute.xlu0 %205
    %v207 = vsel %vm194, %v200, %v202
    %v208 = vsel %vm194, %v204, %v206
    %211 = vrot.lane.b32.xlu0 %v95, 118
    %v212 = vpop.permute.xlu0 %211
    %213 = vrot.lane.b32.xlu0 %v99, 118
    %v214 = vpop.permute.xlu0 %213
    %215 = vrot.lane.b32.xlu0 %v96, 118
    %v216 = vpop.permute.xlu0 %215
    %217 = vrot.lane.b32.xlu0 %v100, 118
    %v218 = vpop.permute.xlu0 %217
    %vm219 = vcmask 965632
    %v220 = vsel %vm219, %v212, %v214
    %v221 = vsel %vm219, %v216, %v218
    %224 = vrot.lane.b32.xlu0 %v97, 118
    %v225 = vpop.permute.xlu0 %224
    %226 = vrot.lane.b32.xlu0 %v101, 118
    %v227 = vpop.permute.xlu0 %226
    %228 = vrot.lane.b32.xlu0 %v98, 118
    %v229 = vpop.permute.xlu0 %228
    %230 = vrot.lane.b32.xlu0 %v102, 118
    %v231 = vpop.permute.xlu0 %230
    %v232 = vsel %vm219, %v225, %v227
    %v233 = vsel %vm219, %v229, %v231
    %236 = vrot.lane.b32.xlu0 %v95, 116
    %v237 = vpop.permute.xlu0 %236
    %238 = vrot.lane.b32.xlu0 %v99, 116
    %v239 = vpop.permute.xlu0 %238
    %240 = vrot.lane.b32.xlu0 %v96, 116
    %v241 = vpop.permute.xlu0 %240
    %242 = vrot.lane.b32.xlu0 %v100, 116
    %v243 = vpop.permute.xlu0 %242
    %vm244 = vcmask 949248
    %v245 = vsel %vm244, %v237, %v239
    %v246 = vsel %vm244, %v241, %v243
    %249 = vrot.lane.b32.xlu0 %v97, 116
    %v250 = vpop.permute.xlu0 %249
    %251 = vrot.lane.b32.xlu0 %v101, 116
    %v252 = vpop.permute.xlu0 %251
    %253 = vrot.lane.b32.xlu0 %v98, 116
    %v254 = vpop.permute.xlu0 %253
    %255 = vrot.lane.b32.xlu0 %v102, 116
    %v256 = vpop.permute.xlu0 %255
    %v257 = vsel %vm244, %v250, %v252
    %v258 = vsel %vm244, %v254, %v256
    %v261 = vld [vmem:[%s1] sm:$0xff]
    %v262 = vld [vmem:[%s1 + $0x8] sm:$0xff]
    %v263 = vld [vmem:[%s1 + $0x10] sm:$0xff]
    %v264 = vld [vmem:[%s1 + $0x18] sm:$0xff]
    %v269 = vunpack.c.l.b16 %v261
    %v270 = vunpack.c.h.b16 %v261
    %v271 = vunpack.c.l.b16 %v262
    %v272 = vunpack.c.h.b16 %v262
    %v273 = vunpack.c.l.b16 %v263
    %v274 = vunpack.c.h.b16 %v263
    %v275 = vunpack.c.l.b16 %v264
    %v276 = vunpack.c.h.b16 %v264
    %v277 = vpack.c.b16 %v271, %v269
    %v278 = vpack.c.b16 %v272, %v270
    %v279 = vpack.c.b16 %v275, %v273
    %v280 = vpack.c.b16 %v276, %v274
    %vm283 = vcmask 785408
    %v285 = vsel %vm283, %v278, 0
    %v288 = vsel %vm283, %v280, 0
    %290 = vmatprep.subr.bf16.mxu0 %v97
    %291 = vmatpush1.bf16.msra.mxu0 %v95
    %292 = vmatprep.subr.bf16.mxu0 %v98
    %293 = vmatpush1.bf16.msra.mxu0 %v96
    %294 = vmatprep.subr.bf16.mxu0 %v132
    %295 = vmatpush1.bf16.msra.mxu0 %v116
    %296 = vmatprep.subr.bf16.mxu0 %v133
    %297 = vmatpush1.bf16.msra.mxu0 %v117
    %298 = vmatprep.subr.bf16.mxu0 %v157
    %299 = vmatpush1.bf16.msra.mxu0 %v145
    %300 = vmatprep.subr.bf16.mxu0 %v158
    %301 = vmatpush1.bf16.msra.mxu0 %v146
    %302 = vmatprep.subr.bf16.mxu0 %v182
    %303 = vmatpush1.bf16.msra.mxu0 %v170
    %304 = vmatprep.subr.bf16.mxu0 %v183
    %305 = vmatpush1.bf16.msra.mxu0 %v171
    %306 = vmatprep.subr.bf16.mxu0 %v207
    %307 = vmatpush1.bf16.msra.mxu0 %v195
    %308 = vmatprep.subr.bf16.mxu0 %v208
    %309 = vmatpush1.bf16.msra.mxu0 %v196
    %310 = vmatprep.subr.bf16.mxu0 %v232
    %311 = vmatpush1.bf16.msra.mxu0 %v220
    %312 = vmatprep.subr.bf16.mxu0 %v233
    %313 = vmatpush1.bf16.msra.mxu0 %v221
    %314 = vmatprep.subr.bf16.mxu0 %v257
    %315 = vmatpush1.bf16.msra.mxu0 %v245
    %316 = vmatprep.subr.bf16.mxu0 %v258
    %317 = vmatpush1.bf16.msra.mxu0 %v246
    %318 = vmatprep.subr.bf16.mxu0 0
    %319 = vmatpush1.bf16.msra.mxu0 0
    %320 = vmatprep.subr.bf16.mxu0 0
    %321 = vmatpush1.bf16.msra.mxu0 0
    %322 = vmatprep.mubr.bf16.mxu0 %v285
    %323 = vmatmul.mubr.bf16.gmra.mrb[0].mxu0 %v277
    %v324 = vpop.f32.mrb[0].mxu0
    %v325 = vadd.f32 0.0, %v324
    %v326 = vpop.f32.mrb[0].mxu0
    %v327 = vadd.f32 0.0, %v326
    %v328 = vpop.f32.mrb[0].mxu0
    %v329 = vadd.f32 0.0, %v328
    %v330 = vpop.f32.mrb[0].mxu0
    %v331 = vadd.f32 0.0, %v330
    %332 = vmatprep.mubr.bf16.mxu0 %v288
    %333 = vmatmul.mubr.bf16.gmra.mrb[0].mxu0 %v279
    %v334 = vpop.f32.mrb[0].mxu0
    %v335 = vadd.f32 0.0, %v334
    %v336 = vpop.f32.mrb[0].mxu0
    %v337 = vadd.f32 0.0, %v336
    %v338 = vpop.f32.mrb[0].mxu0
    %v339 = vadd.f32 0.0, %v338
    %v340 = vpop.f32.mrb[0].mxu0
    %v341 = vadd.f32 0.0, %v340
    %342 = vdwg.mxu0
    %344 = vset.pattern.permute.xlu0 0
    %345 = vperm.xlu0 %344, %v28
    %v346 = vpop.permute.xlu0 %345
    %349 = vset.pattern.permute.xlu0 0
    %350 = vperm.xlu0 %349, %v29
    %v351 = vpop.permute.xlu0 %350
    %354 = vset.pattern.permute.xlu0 0
    %355 = vperm.xlu0 %354, %v30
    %v356 = vpop.permute.xlu0 %355
    %359 = vset.pattern.permute.xlu0 0
    %360 = vperm.xlu0 %359, %v31
    %v361 = vpop.permute.xlu0 %360
    %v363 = vmul.f32 %v325, %v346
    %v364 = vmul.f32 %v327, %v346
    %v365 = vmul.f32 %v329, %v351
    %v366 = vmul.f32 %v331, %v351
    %v367 = vmul.f32 %v335, %v356
    %v368 = vmul.f32 %v337, %v356
    %v369 = vmul.f32 %v339, %v361
    %v370 = vmul.f32 %v341, %v361
    %371 = vset.pattern.permute.xlu0 1
    %372 = vperm.xlu0 %371, %v28
    %v373 = vpop.permute.xlu0 %372
    %375 = vset.pattern.permute.xlu0 1
    %376 = vperm.xlu0 %375, %v29
    %v377 = vpop.permute.xlu0 %376
    %379 = vset.pattern.permute.xlu0 1
    %380 = vperm.xlu0 %379, %v30
    %v381 = vpop.permute.xlu0 %380
    %383 = vset.pattern.permute.xlu0 1
    %384 = vperm.xlu0 %383, %v31
    %v385 = vpop.permute.xlu0 %384
    %v387 = vadd.f32 %v363, %v373
    %v388 = vadd.f32 %v364, %v373
    %v389 = vadd.f32 %v365, %v377
    %v390 = vadd.f32 %v366, %v377
    %v391 = vadd.f32 %v367, %v381
    %v392 = vadd.f32 %v368, %v381
    %v393 = vadd.f32 %v369, %v385
    %v394 = vadd.f32 %v370, %v385
    %v395 = vmax.f32 %v387, 0.0
    %v396 = vmax.f32 %v388, 0.0
    %v397 = vmax.f32 %v389, 0.0
    %v398 = vmax.f32 %v390, 0.0
    %v399 = vmax.f32 %v391, 0.0
    %v400 = vmax.f32 %v392, 0.0
    %v401 = vmax.f32 %v393, 0.0
    %v402 = vmax.f32 %v394, 0.0
    %v403 = vpack.c.bf16 %v397, %v395
    %v404 = vpack.c.bf16 %v401, %v399
    %407 = vrot.lane.b32.xlu0 %v403, 6
    %v408 = vpop.permute.xlu0 %407
    %409 = vrot.lane.b32.xlu0 %v404, 6
    %v410 = vpop.permute.xlu0 %409
    %413 = vst.msk [vmem:[#allocation2] sm:$0xff] %vm65, %v408
    %414 = vst.msk [vmem:[#allocation2 + $0x8] sm:$0xff] %vm34, %v408
    %415 = vst.msk [vmem:[#allocation2 + $0x10] sm:$0xff] %vm65, %v410
    %416 = vst.msk [vmem:[#allocation2 + $0x18] sm:$0xff] %vm34, %v410
    %v417 = vpack.c.bf16 %v398, %v396
    %v418 = vpack.c.bf16 %v402, %v400
    %421 = vrot.lane.b32.xlu0 %v417, 6
    %v422 = vpop.permute.xlu0 %421
    %423 = vrot.lane.b32.xlu0 %v418, 6
    %v424 = vpop.permute.xlu0 %423
    %427 = vst.msk [vmem:[%s40] sm:$0xff] %vm65, %v422
    %428 = vst.msk [vmem:[%s40 + $0x8] sm:$0xff] %vm34, %v422
    %429 = vst.msk [vmem:[%s40 + $0x10] sm:$0xff] %vm65, %v424
    %430 = vst.msk [vmem:[%s40 + $0x18] sm:$0xff] %vm34, %v424
    %v431 = vld [vmem:[#allocation2] sm:$0xff]
    %v432 = vld [vmem:[#allocation2 + $0x10] sm:$0xff]
    %v433 = vld [vmem:[%s40] sm:$0xff]
    %v434 = vld [vmem:[%s40 + $0x10] sm:$0xff]
    %v435 = vld [vmem:[#allocation2 + $0x8] sm:$0xff]
    %v436 = vld [vmem:[#allocation2 + $0x18] sm:$0xff]
    %v437 = vld [vmem:[%s40 + $0x8] sm:$0xff]
    %v438 = vld [vmem:[%s40 + $0x18] sm:$0xff]
    %443 = vrot.lane.b32.xlu0 %v431, 126
    %v444 = vpop.permute.xlu0 %443
    %445 = vrot.lane.b32.xlu0 %v435, 126
    %v446 = vpop.permute.xlu0 %445
    %447 = vrot.lane.b32.xlu0 %v432, 126
    %v448 = vpop.permute.xlu0 %447
    %449 = vrot.lane.b32.xlu0 %v436, 126
    %v450 = vpop.permute.xlu0 %449
    %v451 = vsel %vm115, %v444, %v446
    %v452 = vsel %vm115, %v448, %v450
    %459 = vrot.lane.b32.xlu0 %v433, 126
    %v460 = vpop.permute.xlu0 %459
    %461 = vrot.lane.b32.xlu0 %v437, 126
    %v462 = vpop.permute.xlu0 %461
    %463 = vrot.lane.b32.xlu0 %v434, 126
    %v464 = vpop.permute.xlu0 %463
    %465 = vrot.lane.b32.xlu0 %v438, 126
    %v466 = vpop.permute.xlu0 %465
    %v467 = vsel %vm115, %v460, %v462
    %v468 = vsel %vm115, %v464, %v466
    %471 = vrot.lane.b32.xlu0 %v431, 124
    %v472 = vpop.permute.xlu0 %471
    %473 = vrot.lane.b32.xlu0 %v435, 124
    %v474 = vpop.permute.xlu0 %473
    %475 = vrot.lane.b32.xlu0 %v432, 124
    %v476 = vpop.permute.xlu0 %475
    %477 = vrot.lane.b32.xlu0 %v436, 124
    %v478 = vpop.permute.xlu0 %477
    %v479 = vsel %vm144, %v472, %v474
    %v480 = vsel %vm144, %v476, %v478
    %483 = vrot.lane.b32.xlu0 %v433, 124
    %v484 = vpop.permute.xlu0 %483
    %485 = vrot.lane.b32.xlu0 %v437, 124
    %v486 = vpop.permute.xlu0 %485
    %487 = vrot.lane.b32.xlu0 %v434, 124
    %v488 = vpop.permute.xlu0 %487
    %489 = vrot.lane.b32.xlu0 %v438, 124
    %v490 = vpop.permute.xlu0 %489
    %v491 = vsel %vm144, %v484, %v486
    %v492 = vsel %vm144, %v488, %v490
    %495 = vrot.lane.b32.xlu0 %v431, 122
    %v496 = vpop.permute.xlu0 %495
    %497 = vrot.lane.b32.xlu0 %v435, 122
    %v498 = vpop.permute.xlu0 %497
    %499 = vrot.lane.b32.xlu0 %v432, 122
    %v500 = vpop.permute.xlu0 %499
    %501 = vrot.lane.b32.xlu0 %v436, 122
    %v502 = vpop.permute.xlu0 %501
    %v503 = vsel %vm169, %v496, %v498
    %v504 = vsel %vm169, %v500, %v502
    %507 = vrot.lane.b32.xlu0 %v433, 122
    %v508 = vpop.permute.xlu0 %507
    %509 = vrot.lane.b32.xlu0 %v437, 122
    %v510 = vpop.permute.xlu0 %509
    %511 = vrot.lane.b32.xlu0 %v434, 122
    %v512 = vpop.permute.xlu0 %511
    %513 = vrot.lane.b32.xlu0 %v438, 122
    %v514 = vpop.permute.xlu0 %513
    %v515 = vsel %vm169, %v508, %v510
    %v516 = vsel %vm169, %v512, %v514
    %519 = vrot.lane.b32.xlu0 %v431, 120
    %v520 = vpop.permute.xlu0 %519
    %521 = vrot.lane.b32.xlu0 %v435, 120
    %v522 = vpop.permute.xlu0 %521
    %523 = vrot.lane.b32.xlu0 %v432, 120
    %v524 = vpop.permute.xlu0 %523
    %525 = vrot.lane.b32.xlu0 %v436, 120
    %v526 = vpop.permute.xlu0 %525
    %v527 = vsel %vm194, %v520, %v522
    %v528 = vsel %vm194, %v524, %v526
    %531 = vrot.lane.b32.xlu0 %v433, 120
    %v532 = vpop.permute.xlu0 %531
    %533 = vrot.lane.b32.xlu0 %v437, 120
    %v534 = vpop.permute.xlu0 %533
    %535 = vrot.lane.b32.xlu0 %v434, 120
    %v536 = vpop.permute.xlu0 %535
    %537 = vrot.lane.b32.xlu0 %v438, 120
    %v538 = vpop.permute.xlu0 %537
    %v539 = vsel %vm194, %v532, %v534
    %v540 = vsel %vm194, %v536, %v538
    %543 = vrot.lane.b32.xlu0 %v431, 118
    %v544 = vpop.permute.xlu0 %543
    %545 = vrot.lane.b32.xlu0 %v435, 118
    %v546 = vpop.permute.xlu0 %545
    %547 = vrot.lane.b32.xlu0 %v432, 118
    %v548 = vpop.permute.xlu0 %547
    %549 = vrot.lane.b32.xlu0 %v436, 118
    %v550 = vpop.permute.xlu0 %549
    %v551 = vsel %vm219, %v544, %v546
    %v552 = vsel %vm219, %v548, %v550
    %555 = vrot.lane.b32.xlu0 %v433, 118
    %v556 = vpop.permute.xlu0 %555
    %557 = vrot.lane.b32.xlu0 %v437, 118
    %v558 = vpop.permute.xlu0 %557
    %559 = vrot.lane.b32.xlu0 %v434, 118
    %v560 = vpop.permute.xlu0 %559
    %561 = vrot.lane.b32.xlu0 %v438, 118
    %v562 = vpop.permute.xlu0 %561
    %v563 = vsel %vm219, %v556, %v558
    %v564 = vsel %vm219, %v560, %v562
    %567 = vrot.lane.b32.xlu0 %v431, 116
    %v568 = vpop.permute.xlu0 %567
    %569 = vrot.lane.b32.xlu0 %v435, 116
    %v570 = vpop.permute.xlu0 %569
    %571 = vrot.lane.b32.xlu0 %v432, 116
    %v572 = vpop.permute.xlu0 %571
    %573 = vrot.lane.b32.xlu0 %v436, 116
    %v574 = vpop.permute.xlu0 %573
    %v575 = vsel %vm244, %v568, %v570
    %v576 = vsel %vm244, %v572, %v574
    %579 = vrot.lane.b32.xlu0 %v433, 116
    %v580 = vpop.permute.xlu0 %579
    %581 = vrot.lane.b32.xlu0 %v437, 116
    %v582 = vpop.permute.xlu0 %581
    %583 = vrot.lane.b32.xlu0 %v434, 116
    %v584 = vpop.permute.xlu0 %583
    %585 = vrot.lane.b32.xlu0 %v438, 116
    %v586 = vpop.permute.xlu0 %585
    %v587 = vsel %vm244, %v580, %v582
    %v588 = vsel %vm244, %v584, %v586
    %v591 = vld [vmem:[%s2] sm:$0xff]
    %v592 = vld [vmem:[%s2 + $0x8] sm:$0xff]
    %v593 = vld [vmem:[%s2 + $0x10] sm:$0xff]
    %v594 = vld [vmem:[%s2 + $0x18] sm:$0xff]
    %v599 = vunpack.c.l.b16 %v591
    %v600 = vunpack.c.h.b16 %v591
    %v601 = vunpack.c.l.b16 %v592
    %v602 = vunpack.c.h.b16 %v592
    %v603 = vunpack.c.l.b16 %v593
    %v604 = vunpack.c.h.b16 %v593
    %v605 = vunpack.c.l.b16 %v594
    %v606 = vunpack.c.h.b16 %v594
    %v607 = vpack.c.b16 %v601, %v599
    %v608 = vpack.c.b16 %v602, %v600
    %v609 = vpack.c.b16 %v605, %v603
    %v610 = vpack.c.b16 %v606, %v604
    %v614 = vsel %vm283, %v608, 0
    %v617 = vsel %vm283, %v610, 0
    %619 = vmatprep.subr.bf16.mxu0 %v433
    %620 = vmatpush1.bf16.msra.mxu0 %v431
    %621 = vmatprep.subr.bf16.mxu0 %v434
    %622 = vmatpush1.bf16.msra.mxu0 %v432
    %623 = vmatprep.subr.bf16.mxu0 %v467
    %624 = vmatpush1.bf16.msra.mxu0 %v451
    %625 = vmatprep.subr.bf16.mxu0 %v468
    %626 = vmatpush1.bf16.msra.mxu0 %v452
    %627 = vmatprep.subr.bf16.mxu0 %v491
    %628 = vmatpush1.bf16.msra.mxu0 %v479
    %629 = vmatprep.subr.bf16.mxu0 %v492
    %630 = vmatpush1.bf16.msra.mxu0 %v480
    %631 = vmatprep.subr.bf16.mxu0 %v515
    %632 = vmatpush1.bf16.msra.mxu0 %v503
    %633 = vmatprep.subr.bf16.mxu0 %v516
    %634 = vmatpush1.bf16.msra.mxu0 %v504
    %635 = vmatprep.subr.bf16.mxu0 %v539
    %636 = vmatpush1.bf16.msra.mxu0 %v527
    %637 = vmatprep.subr.bf16.mxu0 %v540
    %638 = vmatpush1.bf16.msra.mxu0 %v528
    %639 = vmatprep.subr.bf16.mxu0 %v563
    %640 = vmatpush1.bf16.msra.mxu0 %v551
    %641 = vmatprep.subr.bf16.mxu0 %v564
    %642 = vmatpush1.bf16.msra.mxu0 %v552
    %643 = vmatprep.subr.bf16.mxu0 %v587
    %644 = vmatpush1.bf16.msra.mxu0 %v575
    %645 = vmatprep.subr.bf16.mxu0 %v588
    %646 = vmatpush1.bf16.msra.mxu0 %v576
    %647 = vmatprep.subr.bf16.mxu0 0
    %648 = vmatpush1.bf16.msra.mxu0 0
    %649 = vmatprep.subr.bf16.mxu0 0
    %650 = vmatpush1.bf16.msra.mxu0 0
    %651 = vmatprep.mubr.bf16.mxu0 %v614
    %652 = vmatmul.mubr.bf16.gmra.mrb[0].mxu0 %v607
    %v653 = vpop.f32.mrb[0].mxu0
    %v654 = vadd.f32 0.0, %v653
    %v655 = vpop.f32.mrb[0].mxu0
    %v656 = vadd.f32 0.0, %v655
    %v657 = vpop.f32.mrb[0].mxu0
    %v658 = vadd.f32 0.0, %v657
    %v659 = vpop.f32.mrb[0].mxu0
    %v660 = vadd.f32 0.0, %v659
    %661 = vmatprep.mubr.bf16.mxu0 %v617
    %662 = vmatmul.mubr.bf16.gmra.mrb[0].mxu0 %v609
    %v663 = vpop.f32.mrb[0].mxu0
    %v664 = vadd.f32 0.0, %v663
    %v665 = vpop.f32.mrb[0].mxu0
    %v666 = vadd.f32 0.0, %v665
    %v667 = vpop.f32.mrb[0].mxu0
    %v668 = vadd.f32 0.0, %v667
    %v669 = vpop.f32.mrb[0].mxu0
    %v670 = vadd.f32 0.0, %v669
    %671 = vdwg.mxu0
    %672 = vset.pattern.permute.xlu0 2
    %673 = vperm.xlu0 %672, %v28
    %v674 = vpop.permute.xlu0 %673
    %676 = vset.pattern.permute.xlu0 2
    %677 = vperm.xlu0 %676, %v29
    %v678 = vpop.permute.xlu0 %677
    %680 = vset.pattern.permute.xlu0 2
    %681 = vperm.xlu0 %680, %v30
    %v682 = vpop.permute.xlu0 %681
    %684 = vset.pattern.permute.xlu0 2
    %685 = vperm.xlu0 %684, %v31
    %v686 = vpop.permute.xlu0 %685
    %v688 = vmul.f32 %v654, %v674
    %v689 = vmul.f32 %v656, %v674
    %v690 = vmul.f32 %v658, %v678
    %v691 = vmul.f32 %v660, %v678
    %v692 = vmul.f32 %v664, %v682
    %v693 = vmul.f32 %v666, %v682
    %v694 = vmul.f32 %v668, %v686
    %v695 = vmul.f32 %v670, %v686
    %696 = vset.pattern.permute.xlu0 3
    %697 = vperm.xlu0 %696, %v28
    %v698 = vpop.permute.xlu0 %697
    %700 = vset.pattern.permute.xlu0 3
    %701 = vperm.xlu0 %700, %v29
    %v702 = vpop.permute.xlu0 %701
    %704 = vset.pattern.permute.xlu0 3
    %705 = vperm.xlu0 %704, %v30
    %v706 = vpop.permute.xlu0 %705
    %708 = vset.pattern.permute.xlu0 3
    %709 = vperm.xlu0 %708, %v31
    %v710 = vpop.permute.xlu0 %709
    %v712 = vadd.f32 %v688, %v698
    %v713 = vadd.f32 %v689, %v698
    %v714 = vadd.f32 %v690, %v702
    %v715 = vadd.f32 %v691, %v702
    %v716 = vadd.f32 %v692, %v706
    %v717 = vadd.f32 %v693, %v706
    %v718 = vadd.f32 %v694, %v710
    %v719 = vadd.f32 %v695, %v710
    %720 = vset.pattern.permute.xlu0 4
    %721 = vperm.xlu0 %720, %v28
    %v722 = vpop.permute.xlu0 %721
    %724 = vset.pattern.permute.xlu0 4
    %725 = vperm.xlu0 %724, %v29
    %v726 = vpop.permute.xlu0 %725
    %728 = vset.pattern.permute.xlu0 4
    %729 = vperm.xlu0 %728, %v30
    %v730 = vpop.permute.xlu0 %729
    %732 = vset.pattern.permute.xlu0 4
    %733 = vperm.xlu0 %732, %v31
    %v734 = vpop.permute.xlu0 %733
    %v736 = vmul.f32 %v712, %v722
    %v737 = vmul.f32 %v714, %v726
    %v738 = vmul.f32 %v716, %v730
    %v739 = vmul.f32 %v718, %v734
    %v740 = vadd.f32 %v736, %v737
    %v741 = vadd.f32 %v740, %v738
    %v742 = vadd.f32 %v741, %v739
    %v743 = vrot.slane %v742, 4
    %v744 = vadd.f32 %v742, %v743
    %v745 = vrot.slane %v744, 2
    %v746 = vadd.f32 %v744, %v745
    %v747 = vrot.slane %v746, 1
    %v748 = vadd.f32 %v746, %v747
    %750 = vset.pattern.permute.xlu0 3
    %751 = vperm.xlu0 %750, %v33
    %v752 = vpop.permute.xlu0 %751
    %v754 = vadd.f32 %v748, %v752
    %vm755 = vcmask 1040384
    %v756 = vsel %vm755, %v754, -inf
    %757 = vmax.xlane.f32.xlu0 %v756
    %v758 = vpop.xlane.xlu0 %757
    %v759 = vsub.f32 %v754, %v758
    %v760 = vmul.f32 %v759, 1.442695
    %v761 = vpow.pop %v760
    %v762 = vsel %vm755, %v761, 0.0
    %763 = vadd.xlane.f32.xlu0 %v762
    %v764 = vpop.xlane.xlu0 %763
    %v765 = vrcp.pop %v764
    %v766 = vmul.f32 %v761, %v765
    %v767 = vlaneseq
    %v768 = vshrl.u32 %v767, 7
    %v769 = vsub.s32 0, %v768
    %v770 = vrot.slane %v766, %v769
    %v771 = vmul.f32 %v712, %v770
    %v772 = vmul.f32 %v714, %v770
    %v773 = vmul.f32 %v716, %v770
    %v774 = vmul.f32 %v718, %v770
    %775 = vadd.xlane.f32.xlu0 %v771
    %v776 = vpop.xlane.xlu0 %775
    %777 = vadd.xlane.f32.xlu0 %v772
    %v778 = vpop.xlane.xlu0 %777
    %779 = vadd.xlane.f32.xlu0 %v773
    %v780 = vpop.xlane.xlu0 %779
    %781 = vadd.xlane.f32.xlu0 %v774
    %v782 = vpop.xlane.xlu0 %781
    %v783 = vld [vmem:[%s4] sm:$0x3]
    %vm784 = vcmask 261120
    %v786 = vsel %vm784, %v783, 0
    %788 = vmatprep.subr.mxu0 0.0
    %789 = vmatpush1.msra.mxu0 %v776
    %790 = vmatprep.subr.mxu0 0.0
    %791 = vmatpush1.msra.mxu0 %v778
    %792 = vmatprep.subr.mxu0 0.0
    %793 = vmatpush1.msra.mxu0 %v780
    %794 = vmatprep.subr.mxu0 0.0
    %795 = vmatpush1.msra.mxu0 %v782
    %796 = vmatprep.subr.mxu0 0.0
    %797 = vmatpush1.msra.mxu0 0.0
    %798 = vmatprep.subr.mxu0 0.0
    %799 = vmatpush1.msra.mxu0 0.0
    %800 = vmatprep.subr.mxu0 0.0
    %801 = vmatpush1.msra.mxu0 0.0
    %802 = vmatprep.subr.mxu0 0.0
    %803 = vmatpush1.msra.mxu0 0.0
    %804 = vmatprep.subr.mxu0 0.0
    %805 = vmatpush1.msra.mxu0 0.0
    %806 = vmatprep.subr.mxu0 0.0
    %807 = vmatpush1.msra.mxu0 0.0
    %808 = vmatprep.subr.mxu0 0.0
    %809 = vmatpush1.msra.mxu0 0.0
    %810 = vmatprep.subr.mxu0 0.0
    %811 = vmatpush1.msra.mxu0 0.0
    %812 = vmatprep.subr.mxu0 0.0
    %813 = vmatpush1.msra.mxu0 0.0
    %814 = vmatprep.subr.mxu0 0.0
    %815 = vmatpush1.msra.mxu0 0.0
    %816 = vmatprep.subr.mxu0 0.0
    %817 = vmatpush1.msra.mxu0 0.0
    %818 = vmatprep.subr.mxu0 0.0
    %819 = vmatpush1.msra.mxu0 0.0
    %820 = vmatprep.subr.mxu0 0.0
    %821 = vmatpush1.msra.mxu0 0.0
    %822 = vmatprep.subr.mxu0 0.0
    %823 = vmatpush1.msra.mxu0 0.0
    %824 = vmatprep.subr.mxu0 0.0
    %825 = vmatpush1.msra.mxu0 0.0
    %826 = vmatprep.subr.mxu0 0.0
    %827 = vmatpush1.msra.mxu0 0.0
    %828 = vmatprep.subr.mxu0 0.0
    %829 = vmatpush1.msra.mxu0 0.0
    %830 = vmatprep.subr.mxu0 0.0
    %831 = vmatpush1.msra.mxu0 0.0
    %832 = vmatprep.subr.mxu0 0.0
    %833 = vmatpush1.msra.mxu0 0.0
    %834 = vmatprep.subr.mxu0 0.0
    %835 = vmatpush1.msra.mxu0 0.0
    %836 = vmatprep.subr.mxu0 0.0
    %837 = vmatpush1.msra.mxu0 0.0
    %838 = vmatprep.subr.mxu0 0.0
    %839 = vmatpush1.msra.mxu0 0.0
    %840 = vmatprep.subr.mxu0 0.0
    %841 = vmatpush1.msra.mxu0 0.0
    %842 = vmatprep.subr.mxu0 0.0
    %843 = vmatpush1.msra.mxu0 0.0
    %844 = vmatprep.subr.mxu0 0.0
    %845 = vmatpush1.msra.mxu0 0.0
    %846 = vmatprep.subr.mxu0 0.0
    %847 = vmatpush1.msra.mxu0 0.0
    %848 = vmatprep.subr.mxu0 0.0
    %849 = vmatpush1.msra.mxu0 0.0
    %850 = vmatprep.subr.mxu0 0.0
    %851 = vmatpush1.msra.mxu0 0.0
    %852 = vmatprep.mubr.f32.mxu0 0.0
    %853 = vmatmul.mubr.f32.gmra.mrb[0].mxu0 %v786
    %v854 = vpop.f32.mrb[0].mxu0
    %v855 = vadd.f32 %v32, %v854
    %v856 = vpop.f32.mrb[0].mxu0
    %857 = vdwg.mxu0
    %vm858 = vcmask 1024
    %v859 = vsel %vm858, %v855, 0.0
    %v860 = vrot.slane %v859, 4
    %v861 = vadd.f32 %v859, %v860
    %v862 = vrot.slane %v861, 2
    %v863 = vadd.f32 %v861, %v862
    %v864 = vrot.slane %v863, 1
    %v865 = vadd.f32 %v863, %v864
    %v866 = vrcp.pop 2.0
    %v867 = vmul.f32 %v865, %v866
    %v868 = vsub.f32 %v855, %v867
    %v869 = vmul.f32 %v868, %v868
    %v870 = vsel %vm858, %v869, 0.0
    %v871 = vrot.slane %v870, 4
    %v872 = vadd.f32 %v870, %v871
    %v873 = vrot.slane %v872, 2
    %v874 = vadd.f32 %v872, %v873
    %v875 = vrot.slane %v874, 1
    %v876 = vadd.f32 %v874, %v875
    %v877 = vmul.f32 %v876, %v866
    %v878 = vadd.f32 %v877, 1e-05
    %v879 = vrsqrt.pop %v878
    %v880 = vmul.f32 %v868, %v879
    %882 = vrot.lane.b32.xlu0 %v32, 127
    %v883 = vpop.permute.xlu0 %882
    %v885 = vmul.f32 %v880, %v883
    %886 = vrot.lane.b32.xlu0 %v32, 126
    %v887 = vpop.permute.xlu0 %886
    %v889 = vadd.f32 %v885, %v887
    %v890 = vmax.f32 %v889, 0.0
    %v891 = vld [vmem:[%s5] sm:$0xff]
    %v892 = vld [vmem:[%s5 + $0x8] sm:$0xff]
    %v893 = vld [vmem:[%s5 + $0x10] sm:$0xff]
    %v894 = vld [vmem:[%s5 + $0x18] sm:$0xff]
    %895 = vrot.lane.b32.xlu0 %v28, 123
    %v896 = vpop.permute.xlu0 %895
    %897 = vrot.lane.b32.xlu0 %v29, 123
    %v898 = vpop.permute.xlu0 %897
    %899 = vrot.lane.b32.xlu0 %v30, 123
    %v900 = vpop.permute.xlu0 %899
    %901 = vrot.lane.b32.xlu0 %v31, 123
    %v902 = vpop.permute.xlu0 %901
    %vm907 = vcmask 15360
    %v909 = vsel %vm907, %v891, 0
    %v912 = vsel %vm907, %v892, 0
    %v915 = vsel %vm907, %v893, 0
    %v918 = vsel %vm907, %v894, 0
    %vm920 = vcmask 1041408
    %v922 = vsel %vm920, %v890, 0
    %924 = vmatprep.subr.mxu0 0.0
    %925 = vmatpush1.msra.mxu0 %v922
    %926 = vmatprep.subr.mxu0 0.0
    %927 = vmatpush1.msra.mxu0 0.0
    %928 = vmatprep.subr.mxu0 0.0
    %929 = vmatpush1.msra.mxu0 0.0
    %930 = vmatprep.subr.mxu0 0.0
    %931 = vmatpush1.msra.mxu0 0.0
    %932 = vmatprep.subr.mxu0 0.0
    %933 = vmatpush1.msra.mxu0 0.0
    %934 = vmatprep.subr.mxu0 0.0
    %935 = vmatpush1.msra.mxu0 0.0
    %936 = vmatprep.subr.mxu0 0.0
    %937 = vmatpush1.msra.mxu0 0.0
    %938 = vmatprep.subr.mxu0 0.0
    %939 = vmatpush1.msra.mxu0 0.0
    %940 = vmatprep.subr.mxu0 0.0
    %941 = vmatpush1.msra.mxu0 0.0
    %942 = vmatprep.subr.mxu0 0.0
    %943 = vmatpush1.msra.mxu0 0.0
    %944 = vmatprep.subr.mxu0 0.0
    %945 = vmatpush1.msra.mxu0 0.0
    %946 = vmatprep.subr.mxu0 0.0
    %947 = vmatpush1.msra.mxu0 0.0
    %948 = vmatprep.subr.mxu0 0.0
    %949 = vmatpush1.msra.mxu0 0.0
    %950 = vmatprep.subr.mxu0 0.0
    %951 = vmatpush1.msra.mxu0 0.0
    %952 = vmatprep.subr.mxu0 0.0
    %953 = vmatpush1.msra.mxu0 0.0
    %954 = vmatprep.subr.mxu0 0.0
    %955 = vmatpush1.msra.mxu0 0.0
    %956 = vmatprep.subr.mxu0 0.0
    %957 = vmatpush1.msra.mxu0 0.0
    %958 = vmatprep.subr.mxu0 0.0
    %959 = vmatpush1.msra.mxu0 0.0
    %960 = vmatprep.subr.mxu0 0.0
    %961 = vmatpush1.msra.mxu0 0.0
    %962 = vmatprep.subr.mxu0 0.0
    %963 = vmatpush1.msra.mxu0 0.0
    %964 = vmatprep.subr.mxu0 0.0
    %965 = vmatpush1.msra.mxu0 0.0
    %966 = vmatprep.subr.mxu0 0.0
    %967 = vmatpush1.msra.mxu0 0.0
    %968 = vmatprep.subr.mxu0 0.0
    %969 = vmatpush1.msra.mxu0 0.0
    %970 = vmatprep.subr.mxu0 0.0
    %971 = vmatpush1.msra.mxu0 0.0
    %972 = vmatprep.subr.mxu0 0.0
    %973 = vmatpush1.msra.mxu0 0.0
    %974 = vmatprep.subr.mxu0 0.0
    %975 = vmatpush1.msra.mxu0 0.0
    %976 = vmatprep.subr.mxu0 0.0
    %977 = vmatpush1.msra.mxu0 0.0
    %978 = vmatprep.subr.mxu0 0.0
    %979 = vmatpush1.msra.mxu0 0.0
    %980 = vmatprep.subr.mxu0 0.0
    %981 = vmatpush1.msra.mxu0 0.0
    %982 = vmatprep.subr.mxu0 0.0
    %983 = vmatpush1.msra.mxu0 0.0
    %984 = vmatprep.subr.mxu0 0.0
    %985 = vmatpush1.msra.mxu0 0.0
    %986 = vmatprep.subr.mxu0 0.0
    %987 = vmatpush1.msra.mxu0 0.0
    %988 = vmatprep.mubr.f32.mxu0 0.0
    %989 = vmatmul.mubr.f32.gmra.mrb[0].mxu0 %v909
    %v990 = vpop.f32.mrb[0].mxu0
    %v991 = vadd.f32 %v896, %v990
    %v992 = vpop.f32.mrb[0].mxu0
    %993 = vmatprep.mubr.f32.mxu0 0.0
    %994 = vmatmul.mubr.f32.gmra.mrb[0].mxu0 %v912
    %v995 = vpop.f32.mrb[0].mxu0
    %v996 = vadd.f32 %v898, %v995
    %v997 = vpop.f32.mrb[0].mxu0
    %998 = vmatprep.mubr.f32.mxu0 0.0
    %999 = vmatmul.mubr.f32.gmra.mrb[0].mxu0 %v915
    %v1000 = vpop.f32.mrb[0].mxu0
    %v1001 = vadd.f32 %v900, %v1000
    %v1002 = vpop.f32.mrb[0].mxu0
    %1003 = vmatprep.mubr.f32.mxu0 0.0
    %1004 = vmatmul.mubr.f32.gmra.mrb[0].mxu0 %v918
    %v1005 = vpop.f32.mrb[0].mxu0
    %v1006 = vadd.f32 %v902, %v1005
    %v1007 = vpop.f32.mrb[0].mxu0
    %1008 = vdwg.mxu0
    %v1009 = vxor.u32 %v991, 2147483648
    %v1010 = vxor.u32 %v996, 2147483648
    %v1011 = vxor.u32 %v1001, 2147483648
    %v1012 = vxor.u32 %v1006, 2147483648
    %v1013 = vmul.f32 %v1009, 1.442695
    %v1014 = vpow.pop %v1013
    %v1015 = vmul.f32 %v1010, 1.442695
    %v1016 = vpow.pop %v1015
    %v1017 = vmul.f32 %v1011, 1.442695
    %v1018 = vpow.pop %v1017
    %v1019 = vmul.f32 %v1012, 1.442695
    %v1020 = vpow.pop %v1019
    %v1021 = vadd.f32 %v1014, 1.0
    %v1022 = vadd.f32 %v1016, 1.0
    %v1023 = vadd.f32 %v1018, 1.0
    %v1024 = vadd.f32 %v1020, 1.0
    %v1025 = vrcp.pop %v1021
    %v1026 = vmul.f32 1.0, %v1025
    %v1027 = vrcp.pop %v1022
    %v1028 = vmul.f32 1.0, %v1027
    %v1029 = vrcp.pop %v1023
    %v1030 = vmul.f32 1.0, %v1029
    %v1031 = vrcp.pop %v1024
    %v1032 = vmul.f32 1.0, %v1031
    %1034 = vset.pattern.permute.xlu0 0
    %1035 = vperm.xlu0 %1034, %v1026
    %v1036 = vpop.permute.xlu0 %1035
    %1039 = vset.pattern.permute.xlu0 0
    %1040 = vperm.xlu0 %1039, %v1028
    %v1041 = vpop.permute.xlu0 %1040
    %1044 = vset.pattern.permute.xlu0 0
    %1045 = vperm.xlu0 %1044, %v1030
    %v1046 = vpop.permute.xlu0 %1045
    %1049 = vset.pattern.permute.xlu0 0
    %1050 = vperm.xlu0 %1049, %v1032
    %v1051 = vpop.permute.xlu0 %1050
    %v1053 = vmul.f32 %v712, %v1036
    %v1054 = vmul.f32 %v714, %v1041
    %v1055 = vmul.f32 %v716, %v1046
    %v1056 = vmul.f32 %v718, %v1051
    %v1057 = vld [vmem:[%s0] sm:$0xf]
    %v1058 = vld [vmem:[%s0 + $0x4] sm:$0xf]
    %v1059 = vld [vmem:[%s0 + $0x8] sm:$0xf]
    %v1060 = vld [vmem:[%s0 + $0xc] sm:$0xf]
    %v1061 = vunpack.c.l.bf16 %v1057
    %v1062 = vunpack.c.l.bf16 %v1058
    %v1063 = vunpack.c.l.bf16 %v1059
    %v1064 = vunpack.c.l.bf16 %v1060
    %v1065 = vadd.f32 %v1053, %v1061
    %v1066 = vadd.f32 %v1054, %v1062
    %v1067 = vadd.f32 %v1055, %v1063
    %v1068 = vadd.f32 %v1056, %v1064
    %v1069 = vmax.f32 %v1065, 0.0
    %v1070 = vmax.f32 %v1066, 0.0
    %v1071 = vmax.f32 %v1067, 0.0
    %v1072 = vmax.f32 %v1068, 0.0
    %v1073 = vpack.c.bf16 %v1070, %v1069
    %v1074 = vpack.c.bf16 %v1072, %v1071
    %v1077 = vunpack.c.l.b16 %v1073
    %v1078 = vunpack.c.h.b16 %v1073
    %v1079 = vunpack.c.l.b16 %v1074
    %v1080 = vunpack.c.h.b16 %v1074
    %v1081 = vpack.c.b16 %v1077, %v1077
    %v1082 = vpack.c.b16 %v1078, %v1078
    %v1083 = vpack.c.b16 %v1079, %v1079
    %v1084 = vpack.c.b16 %v1080, %v1080
    %1089 = vst [vmem:[#allocation3] sm:$0xf] %v1081
    %1090 = vst [vmem:[#allocation3 + $0x4] sm:$0xf] %v1082
    %1091 = vst [vmem:[#allocation3 + $0x8] sm:$0xf] %v1083
    %1092 = vst [vmem:[#allocation3 + $0xc] sm:$0xf] %v1084
    %v1093 = vmul.f32 %v713, %v722
    %v1094 = vmul.f32 %v715, %v726
    %v1095 = vmul.f32 %v717, %v730
    %v1096 = vmul.f32 %v719, %v734
    %v1097 = vadd.f32 %v1093, %v1094
    %v1098 = vadd.f32 %v1097, %v1095
    %v1099 = vadd.f32 %v1098, %v1096
    %v1100 = vrot.slane %v1099, 4
    %v1101 = vadd.f32 %v1099, %v1100
    %v1102 = vrot.slane %v1101, 2
    %v1103 = vadd.f32 %v1101, %v1102
    %v1104 = vrot.slane %v1103, 1
    %v1105 = vadd.f32 %v1103, %v1104
    %v1106 = vadd.f32 %v1105, %v752
    %v1107 = vsel %vm755, %v1106, -inf
    %1108 = vmax.xlane.f32.xlu0 %v1107
    %v1109 = vpop.xlane.xlu0 %1108
    %v1110 = vsub.f32 %v1106, %v1109
    %v1111 = vmul.f32 %v1110, 1.442695
    %v1112 = vpow.pop %v1111
    %v1113 = vsel %vm755, %v1112, 0.0
    %1114 = vadd.xlane.f32.xlu0 %v1113
    %v1115 = vpop.xlane.xlu0 %1114
    %v1116 = vrcp.pop %v1115
    %v1117 = vmul.f32 %v1112, %v1116
    %v1118 = vlaneseq
    %v1119 = vshrl.u32 %v1118, 7
    %v1120 = vsub.s32 0, %v1119
    %v1121 = vrot.slane %v1117, %v1120
    %v1122 = vmul.f32 %v713, %v1121
    %v1123 = vmul.f32 %v715, %v1121
    %v1124 = vmul.f32 %v717, %v1121
    %v1125 = vmul.f32 %v719, %v1121
    %1126 = vadd.xlane.f32.xlu0 %v1122
    %v1127 = vpop.xlane.xlu0 %1126
    %1128 = vadd.xlane.f32.xlu0 %v1123
    %v1129 = vpop.xlane.xlu0 %1128
    %1130 = vadd.xlane.f32.xlu0 %v1124
    %v1131 = vpop.xlane.xlu0 %1130
    %1132 = vadd.xlane.f32.xlu0 %v1125
    %v1133 = vpop.xlane.xlu0 %1132
    %v1134 = vld [vmem:[%s4] sm:$0x3]
    %v1136 = vsel %vm784, %v1134, 0
    %1138 = vmatprep.subr.mxu0 0.0
    %1139 = vmatpush1.msra.mxu0 %v1127
    %1140 = vmatprep.subr.mxu0 0.0
    %1141 = vmatpush1.msra.mxu0 %v1129
    %1142 = vmatprep.subr.mxu0 0.0
    %1143 = vmatpush1.msra.mxu0 %v1131
    %1144 = vmatprep.subr.mxu0 0.0
    %1145 = vmatpush1.msra.mxu0 %v1133
    %1146 = vmatprep.subr.mxu0 0.0
    %1147 = vmatpush1.msra.mxu0 0.0
    %1148 = vmatprep.subr.mxu0 0.0
    %1149 = vmatpush1.msra.mxu0 0.0
    %1150 = vmatprep.subr.mxu0 0.0
    %1151 = vmatpush1.msra.mxu0 0.0
    %1152 = vmatprep.subr.mxu0 0.0
    %1153 = vmatpush1.msra.mxu0 0.0
    %1154 = vmatprep.subr.mxu0 0.0
    %1155 = vmatpush1.msra.mxu0 0.0
    %1156 = vmatprep.subr.mxu0 0.0
    %1157 = vmatpush1.msra.mxu0 0.0
    %1158 = vmatprep.subr.mxu0 0.0
    %1159 = vmatpush1.msra.mxu0 0.0
    %1160 = vmatprep.subr.mxu0 0.0
    %1161 = vmatpush1.msra.mxu0 0.0
    %1162 = vmatprep.subr.mxu0 0.0
    %1163 = vmatpush1.msra.mxu0 0.0
    %1164 = vmatprep.subr.mxu0 0.0
    %1165 = vmatpush1.msra.mxu0 0.0
    %1166 = vmatprep.subr.mxu0 0.0
    %1167 = vmatpush1.msra.mxu0 0.0
    %1168 = vmatprep.subr.mxu0 0.0
    %1169 = vmatpush1.msra.mxu0 0.0
    %1170 = vmatprep.subr.mxu0 0.0
    %1171 = vmatpush1.msra.mxu0 0.0
    %1172 = vmatprep.subr.mxu0 0.0
    %1173 = vmatpush1.msra.mxu0 0.0
    %1174 = vmatprep.subr.mxu0 0.0
    %1175 = vmatpush1.msra.mxu0 0.0
    %1176 = vmatprep.subr.mxu0 0.0
    %1177 = vmatpush1.msra.mxu0 0.0
    %1178 = vmatprep.subr.mxu0 0.0
    %1179 = vmatpush1.msra.mxu0 0.0
    %1180 = vmatprep.subr.mxu0 0.0
    %1181 = vmatpush1.msra.mxu0 0.0
    %1182 = vmatprep.subr.mxu0 0.0
    %1183 = vmatpush1.msra.mxu0 0.0
    %1184 = vmatprep.subr.mxu0 0.0
    %1185 = vmatpush1.msra.mxu0 0.0
    %1186 = vmatprep.subr.mxu0 0.0
    %1187 = vmatpush1.msra.mxu0 0.0
    %1188 = vmatprep.subr.mxu0 0.0
    %1189 = vmatpush1.msra.mxu0 0.0
    %1190 = vmatprep.subr.mxu0 0.0
    %1191 = vmatpush1.msra.mxu0 0.0
    %1192 = vmatprep.subr.mxu0 0.0
    %1193 = vmatpush1.msra.mxu0 0.0
    %1194 = vmatprep.subr.mxu0 0.0
    %1195 = vmatpush1.msra.mxu0 0.0
    %1196 = vmatprep.subr.mxu0 0.0
    %1197 = vmatpush1.msra.mxu0 0.0
    %1198 = vmatprep.subr.mxu0 0.0
    %1199 = vmatpush1.msra.mxu0 0.0
    %1200 = vmatprep.subr.mxu0 0.0
    %1201 = vmatpush1.msra.mxu0 0.0
    %1202 = vmatprep.mubr.f32.mxu0 0.0
    %1203 = vmatmul.mubr.f32.gmra.mrb[0].mxu0 %v1136
    %v1204 = vpop.f32.mrb[0].mxu0
    %v1205 = vadd.f32 %v32, %v1204
    %v1206 = vpop.f32.mrb[0].mxu0
    %1207 = vdwg.mxu0
    %v1208 = vsel %vm858, %v1205, 0.0
    %v1209 = vrot.slane %v1208, 4
    %v1210 = vadd.f32 %v1208, %v1209
    %v1211 = vrot.slane %v1210, 2
    %v1212 = vadd.f32 %v1210, %v1211
    %v1213 = vrot.slane %v1212, 1
    %v1214 = vadd.f32 %v1212, %v1213
    %v1215 = vmul.f32 %v1214, %v866
    %v1216 = vsub.f32 %v1205, %v1215
    %v1217 = vmul.f32 %v1216, %v1216
    %v1218 = vsel %vm858, %v1217, 0.0
    %v1219 = vrot.slane %v1218, 4
    %v1220 = vadd.f32 %v1218, %v1219
    %v1221 = vrot.slane %v1220, 2
    %v1222 = vadd.f32 %v1220, %v1221
    %v1223 = vrot.slane %v1222, 1
    %v1224 = vadd.f32 %v1222, %v1223
    %v1225 = vmul.f32 %v1224, %v866
    %v1226 = vadd.f32 %v1225, 1e-05
    %v1227 = vrsqrt.pop %v1226
    %v1228 = vmul.f32 %v1216, %v1227
    %v1229 = vmul.f32 %v1228, %v883
    %v1230 = vadd.f32 %v1229, %v887
    %v1231 = vmax.f32 %v1230, 0.0
    %v1232 = vld [vmem:[%s5] sm:$0xff]
    %v1233 = vld [vmem:[%s5 + $0x8] sm:$0xff]
    %v1234 = vld [vmem:[%s5 + $0x10] sm:$0xff]
    %v1235 = vld [vmem:[%s5 + $0x18] sm:$0xff]
    %v1237 = vsel %vm907, %v1232, 0
    %v1240 = vsel %vm907, %v1233, 0
    %v1243 = vsel %vm907, %v1234, 0
    %v1246 = vsel %vm907, %v1235, 0
    %v1249 = vsel %vm920, %v1231, 0
    %1251 = vmatprep.subr.mxu0 0.0
    %1252 = vmatpush1.msra.mxu0 %v1249
    %1253 = vmatprep.subr.mxu0 0.0
    %1254 = vmatpush1.msra.mxu0 0.0
    %1255 = vmatprep.subr.mxu0 0.0
    %1256 = vmatpush1.msra.mxu0 0.0
    %1257 = vmatprep.subr.mxu0 0.0
    %1258 = vmatpush1.msra.mxu0 0.0
    %1259 = vmatprep.subr.mxu0 0.0
    %1260 = vmatpush1.msra.mxu0 0.0
    %1261 = vmatprep.subr.mxu0 0.0
    %1262 = vmatpush1.msra.mxu0 0.0
    %1263 = vmatprep.subr.mxu0 0.0
    %1264 = vmatpush1.msra.mxu0 0.0
    %1265 = vmatprep.subr.mxu0 0.0
    %1266 = vmatpush1.msra.mxu0 0.0
    %1267 = vmatprep.subr.mxu0 0.0
    %1268 = vmatpush1.msra.mxu0 0.0
    %1269 = vmatprep.subr.mxu0 0.0
    %1270 = vmatpush1.msra.mxu0 0.0
    %1271 = vmatprep.subr.mxu0 0.0
    %1272 = vmatpush1.msra.mxu0 0.0
    %1273 = vmatprep.subr.mxu0 0.0
    %1274 = vmatpush1.msra.mxu0 0.0
    %1275 = vmatprep.subr.mxu0 0.0
    %1276 = vmatpush1.msra.mxu0 0.0
    %1277 = vmatprep.subr.mxu0 0.0
    %1278 = vmatpush1.msra.mxu0 0.0
    %1279 = vmatprep.subr.mxu0 0.0
    %1280 = vmatpush1.msra.mxu0 0.0
    %1281 = vmatprep.subr.mxu0 0.0
    %1282 = vmatpush1.msra.mxu0 0.0
    %1283 = vmatprep.subr.mxu0 0.0
    %1284 = vmatpush1.msra.mxu0 0.0
    %1285 = vmatprep.subr.mxu0 0.0
    %1286 = vmatpush1.msra.mxu0 0.0
    %1287 = vmatprep.subr.mxu0 0.0
    %1288 = vmatpush1.msra.mxu0 0.0
    %1289 = vmatprep.subr.mxu0 0.0
    %1290 = vmatpush1.msra.mxu0 0.0
    %1291 = vmatprep.subr.mxu0 0.0
    %1292 = vmatpush1.msra.mxu0 0.0
    %1293 = vmatprep.subr.mxu0 0.0
    %1294 = vmatpush1.msra.mxu0 0.0
    %1295 = vmatprep.subr.mxu0 0.0
    %1296 = vmatpush1.msra.mxu0 0.0
    %1297 = vmatprep.subr.mxu0 0.0
    %1298 = vmatpush1.msra.mxu0 0.0
    %1299 = vmatprep.subr.mxu0 0.0
    %1300 = vmatpush1.msra.mxu0 0.0
    %1301 = vmatprep.subr.mxu0 0.0
    %1302 = vmatpush1.msra.mxu0 0.0
    %1303 = vmatprep.subr.mxu0 0.0
    %1304 = vmatpush1.msra.mxu0 0.0
    %1305 = vmatprep.subr.mxu0 0.0
    %1306 = vmatpush1.msra.mxu0 0.0
    %1307 = vmatprep.subr.mxu0 0.0
    %1308 = vmatpush1.msra.mxu0 0.0
    %1309 = vmatprep.subr.mxu0 0.0
    %1310 = vmatpush1.msra.mxu0 0.0
    %1311 = vmatprep.subr.mxu0 0.0
    %1312 = vmatpush1.msra.mxu0 0.0
    %1313 = vmatprep.subr.mxu0 0.0
    %1314 = vmatpush1.msra.mxu0 0.0
    %1315 = vmatprep.mubr.f32.mxu0 0.0
    %1316 = vmatmul.mubr.f32.gmra.mrb[0].mxu0 %v1237
    %v1317 = vpop.f32.mrb[0].mxu0
    %v1318 = vadd.f32 %v896, %v1317
    %v1319 = vpop.f32.mrb[0].mxu0
    %1320 = vmatprep.mubr.f32.mxu0 0.0
    %1321 = vmatmul.mubr.f32.gmra.mrb[0].mxu0 %v1240
    %v1322 = vpop.f32.mrb[0].mxu0
    %v1323 = vadd.f32 %v898, %v1322
    %v1324 = vpop.f32.mrb[0].mxu0
    %1325 = vmatprep.mubr.f32.mxu0 0.0
    %1326 = vmatmul.mubr.f32.gmra.mrb[0].mxu0 %v1243
    %v1327 = vpop.f32.mrb[0].mxu0
    %v1328 = vadd.f32 %v900, %v1327
    %v1329 = vpop.f32.mrb[0].mxu0
    %1330 = vmatprep.mubr.f32.mxu0 0.0
    %1331 = vmatmul.mubr.f32.gmra.mrb[0].mxu0 %v1246
    %v1332 = vpop.f32.mrb[0].mxu0
    %v1333 = vadd.f32 %v902, %v1332
    %v1334 = vpop.f32.mrb[0].mxu0
    %1335 = vdwg.mxu0
    %v1336 = vxor.u32 %v1318, 2147483648
    %v1337 = vxor.u32 %v1323, 2147483648
    %v1338 = vxor.u32 %v1328, 2147483648
    %v1339 = vxor.u32 %v1333, 2147483648
    %v1340 = vmul.f32 %v1336, 1.442695
    %v1341 = vpow.pop %v1340
    %v1342 = vmul.f32 %v1337, 1.442695
    %v1343 = vpow.pop %v1342
    %v1344 = vmul.f32 %v1338, 1.442695
    %v1345 = vpow.pop %v1344
    %v1346 = vmul.f32 %v1339, 1.442695
    %v1347 = vpow.pop %v1346
    %v1348 = vadd.f32 %v1341, 1.0
    %v1349 = vadd.f32 %v1343, 1.0
    %v1350 = vadd.f32 %v1345, 1.0
    %v1351 = vadd.f32 %v1347, 1.0
    %v1352 = vrcp.pop %v1348
    %v1353 = vmul.f32 1.0, %v1352
    %v1354 = vrcp.pop %v1349
    %v1355 = vmul.f32 1.0, %v1354
    %v1356 = vrcp.pop %v1350
    %v1357 = vmul.f32 1.0, %v1356
    %v1358 = vrcp.pop %v1351
    %v1359 = vmul.f32 1.0, %v1358
    %1361 = vset.pattern.permute.xlu0 0
    %1362 = vperm.xlu0 %1361, %v1353
    %v1363 = vpop.permute.xlu0 %1362
    %1366 = vset.pattern.permute.xlu0 0
    %1367 = vperm.xlu0 %1366, %v1355
    %v1368 = vpop.permute.xlu0 %1367
    %1371 = vset.pattern.permute.xlu0 0
    %1372 = vperm.xlu0 %1371, %v1357
    %v1373 = vpop.permute.xlu0 %1372
    %1376 = vset.pattern.permute.xlu0 0
    %1377 = vperm.xlu0 %1376, %v1359
    %v1378 = vpop.permute.xlu0 %1377
    %v1380 = vmul.f32 %v713, %v1363
    %v1381 = vmul.f32 %v715, %v1368
    %v1382 = vmul.f32 %v717, %v1373
    %v1383 = vmul.f32 %v719, %v1378
    %v1384 = vld [vmem:[%s70] sm:$0xf]
    %v1385 = vld [vmem:[%s70 + $0x4] sm:$0xf]
    %v1386 = vld [vmem:[%s70 + $0x8] sm:$0xf]
    %v1387 = vld [vmem:[%s70 + $0xc] sm:$0xf]
    %v1388 = vunpack.c.l.bf16 %v1384
    %v1389 = vunpack.c.l.bf16 %v1385
    %v1390 = vunpack.c.l.bf16 %v1386
    %v1391 = vunpack.c.l.bf16 %v1387
    %v1392 = vadd.f32 %v1380, %v1388
    %v1393 = vadd.f32 %v1381, %v1389
    %v1394 = vadd.f32 %v1382, %v1390
    %v1395 = vadd.f32 %v1383, %v1391
    %v1396 = vmax.f32 %v1392, 0.0
    %v1397 = vmax.f32 %v1393, 0.0
    %v1398 = vmax.f32 %v1394, 0.0
    %v1399 = vmax.f32 %v1395, 0.0
    %v1400 = vpack.c.bf16 %v1397, %v1396
    %v1401 = vpack.c.bf16 %v1399, %v1398
    %v1404 = vunpack.c.l.b16 %v1400
    %v1405 = vunpack.c.h.b16 %v1400
    %v1406 = vunpack.c.l.b16 %v1401
    %v1407 = vunpack.c.h.b16 %v1401
    %v1408 = vpack.c.b16 %v1404, %v1404
    %v1409 = vpack.c.b16 %v1405, %v1405
    %v1410 = vpack.c.b16 %v1406, %v1406
    %v1411 = vpack.c.b16 %v1407, %v1407
    %s1416 = scalar_lea.vmem [#allocation3], 16
    %1417 = vst [vmem:[%s1416] sm:$0xf] %v1408
    %1418 = vst [vmem:[%s1416 + $0x4] sm:$0xf] %v1409
    %1419 = vst [vmem:[%s1416 + $0x8] sm:$0xf] %v1410
    %1420 = vst [vmem:[%s1416 + $0xc] sm:$0xf] %v1411
    // Predicated region
    $region30: #{residual_block_pallas.1} parent=1 // pred_check
      _
    $region31: #{residual_block_pallas.1} parent=1 // pred_check_branch
      %1422 = sbr.rel (0) target = $region33
    $region32: #{residual_block_pallas.1} parent=1 // pred_region
      %s1424 = ssub.s32 512, 512
      %1425 = vsyncadd [#allocation4], %s1424
      %s1426 = sshll.u32 [#allocation3], 4
      %s1427 = int_to_ptr.vmem [resolvable:$true] %s1426
      %1432 = dma.vmem_to_hbm [thread:$0]  %s1427, 512, %s7, [#allocation4], 64, 64, 4
    $region33: #{residual_block_pallas.1} parent=1 // pred_fallthru
      _
    // Predicated region
    $region34: #{residual_block_pallas.1} parent=1 // pred_check
      _
    $region35: #{residual_block_pallas.1} parent=1 // pred_check_branch
      %1434 = sbr.rel (0) target = $region37
    $region36: #{residual_block_pallas.1} parent=1 // pred_region
      %1435 = dma.done [#allocation4], 512
    $region37: #{residual_block_pallas.1} parent=1 // pred_fallthru
      _
    %1436 = vsyncpa [#allocation4], 1

</llo_original>
